<compile_context>
chip_gen: v7x
topology: tpu7x:2x2x1
jax: 0.10.0
libtpu: 0.0.40
codegen_flags: <defaults>
</compile_context>

<pallas_src>
import functools

import jax
import jax.numpy as jnp
from jax import lax
from jax.experimental import pallas as pl
from jax.experimental.pallas import tpu as pltpu


def _attention_kernel(x_ref, wqkv_ref, bqkv_ref, wout_ref, bout_ref, o_ref,
                      *, n_embd, n_head, q_block, batch_block):
    C = n_embd
    dh = C // n_head
    S = x_ref.shape[-1]
    n_q = S // q_block

    # Ones row for the MXU row-sum (gives l directly in (1, TQ) lane layout).
    ones_row = jnp.ones((1, S), dtype=jnp.float32)

    for b in range(batch_block):                    # static, unrolled
        x = x_ref[b]                                # (C, S), model dtype

        # QKV projection, channel-major: (3C, C) @ (C, S) -> (3C, S), f32.
        # 1/sqrt(dh) is already folded into the q-rows of W^T and b.
        qkv = jnp.dot(wqkv_ref[...], x, preferred_element_type=jnp.float32)
        qkv = qkv + bqkv_ref[...]                   # (3C, 1) broadcasts over S

        for qi in range(n_q):                       # query-row blocks (static)
            qs = qi * q_block
            acc = None                              # (C, TQ) f32, over heads
            for h in range(n_head):                 # static head loop
                lo = h * dh
                q_h = qkv[lo:lo + dh, qs:qs + q_block]        # (dh, TQ)
                k_h = qkv[C + lo:C + lo + dh, :]              # (dh, S)
                v_h = qkv[2 * C + lo:2 * C + lo + dh, :]      # (dh, S)

                # scores[q, k] = sum_d q_h[d, q] * k_h[d, k] -> (TQ, S)
                s = lax.dot_general(q_h, k_h, (((0,), (0,)), ((), ())),
                                    preferred_element_type=jnp.float32)

                # Stable, *un-normalized* softmax numerator.
                m = jnp.max(s, axis=-1, keepdims=True)        # (TQ, 1)
                p = jnp.exp(s - m)                            # (TQ, S), f32

                # ctx[d, q] = sum_k v_h[d, k] * p[q, k]  -> (dh, TQ)
                ctx = lax.dot_general(v_h, p, (((1,), (1,)), ((), ())),
                                      preferred_element_type=jnp.float32)
                # l[q] = sum_k p[q, k], produced directly as (1, TQ) on the MXU.
                l_row = lax.dot_general(ones_row, p, (((1,), (1,)), ((), ())),
                                        preferred_element_type=jnp.float32)
                # Deferred normalization on the small (dh, TQ) context.
                ctx = ctx * pl.reciprocal(l_row, approx=False)

                # Per-head slice of the output projection: (C, dh) @ (dh, TQ).
                out_h = jnp.dot(wout_ref[:, lo:lo + dh], ctx,
                                preferred_element_type=jnp.float32)
                acc = out_h if acc is None else acc + out_h

            # Residual + output bias, stored as a lane-dense 128-wide block.
            xq = x[:, qs:qs + q_block].astype(jnp.float32)
            o_ref[b, :, qs:qs + q_block] = (
                xq + bout_ref[...] + acc).astype(o_ref.dtype)


def altan_attention(x_nchw, wqkv, bqkv, wout, bout, *, n_head=1,
                    q_block=None, batch_block=None):
    """x: (B, C, H, W); wqkv: (C, 3C); wout: (C, C); biases 1-D or (1, N)."""
    B, C, H, W = x_nchw.shape
    if C % n_head != 0:
        raise ValueError(f"n_embd={C} must be divisible by n_head={n_head}")
    S = H * W
    dh = C // n_head
    dtype = x_nchw.dtype

    # Query-row block: 128 rows when S is lane-aligned, else the whole thing.
    if q_block is None:
        q_block = 128 if S % 128 == 0 else S
    if S % q_block != 0:
        raise ValueError(f"S={S} must be divisible by q_block={q_block}")

    # Batch elements per grid step (amortizes per-step overhead; VMEM per step
    # is tiny at these shapes).
    if batch_block is None:
        batch_block = next(c for c in (4, 2, 1) if B % c == 0)
    if B % batch_block != 0:
        raise ValueError(f"B={B} must be divisible by batch_block={batch_block}")

    # Channel-major (B, C, S): a pure reshape of NCHW, no HBM transpose passes.
    x_cs = x_nchw.reshape(B, C, S)

    # PyTorch Linear is y = x @ W + b with W: (in, out); in channel-major
    # layout the projections are W^T @ x. Fold 1/sqrt(dh) into the q rows.
    scale = 1.0 / (dh ** 0.5)
    q_scale = jnp.concatenate([jnp.full((C, 1), scale, jnp.float32),
                               jnp.ones((2 * C, 1), jnp.float32)], axis=0)
    wqkv_t = (wqkv.T.astype(jnp.float32) * q_scale).astype(dtype)   # (3C, C)
    bqkv_col = jnp.reshape(bqkv, (3 * C, 1)).astype(jnp.float32) * q_scale
    wout_t = wout.T.astype(dtype)                                   # (C, C)
    bout_col = jnp.reshape(bout, (C, 1)).astype(jnp.float32)

    kernel = functools.partial(_attention_kernel, n_embd=C, n_head=n_head,
                               q_block=q_block, batch_block=batch_block)

    out_cs = pl.pallas_call(
        kernel,
        out_shape=jax.ShapeDtypeStruct((B, C, S), dtype),
        grid_spec=pltpu.PrefetchScalarGridSpec(
            num_scalar_prefetch=0,
            grid=(B // batch_block,),
            in_specs=[
                pl.BlockSpec((batch_block, C, S), lambda b: (b, 0, 0)),  # x
                pl.BlockSpec((3 * C, C), lambda b: (0, 0)),   # W_qkv^T (scaled)
                pl.BlockSpec((3 * C, 1), lambda b: (0, 0)),   # b_qkv column
                pl.BlockSpec((C, C), lambda b: (0, 0)),       # W_out^T
                pl.BlockSpec((C, 1), lambda b: (0, 0)),       # b_out column
            ],
            out_specs=pl.BlockSpec((batch_block, C, S), lambda b: (b, 0, 0)),
        ),
        compiler_params=pltpu.CompilerParams(
            dimension_semantics=("parallel",)),
    )(x_cs, wqkv_t, bqkv_col, wout_t, bout_col)

    # (B, C, S) -> NCHW is again just a reshape.
    return out_cs.reshape(B, C, H, W)


def _reference(x_nchw, wqkv, bqkv, wout, bout, *, n_head=1):
    """Pure-JAX reference mirroring the PyTorch forward (sequence-major)."""
    B, C, H, W = x_nchw.shape
    S = H * W
    dh = C // n_head
    x = x_nchw.reshape(B, C, S).transpose(0, 2, 1)             # (B, S, C)
    qkv = x @ wqkv + jnp.reshape(bqkv, (-1,))                  # (B, S, 3C)
    q, k, v = jnp.split(qkv, 3, axis=-1)
    q = q.reshape(B, S, n_head, dh).transpose(0, 2, 1, 3)
    k = k.reshape(B, S, n_head, dh).transpose(0, 2, 1, 3)
    v = v.reshape(B, S, n_head, dh).transpose(0, 2, 1, 3)
    s = jnp.einsum('bhqd,bhkd->bhqk', q, k) / (dh ** 0.5)
    p = jax.nn.softmax(s, axis=-1)
    ctx = jnp.einsum('bhqk,bhkd->bhqd', p, v)
    ctx = ctx.transpose(0, 2, 1, 3).reshape(B, S, C)
    out = ctx @ wout + jnp.reshape(bout, (-1,))
    return x_nchw + out.transpose(0, 2, 1).reshape(B, C, H, W)


def _run_case(key, B, C, H, W, n_head, bias_2d):
    kx, kw1, kb1, kw2, kb2 = jax.random.split(key, 5)
    x = jax.random.normal(kx, (B, C, H, W), dtype=jnp.float32)

    scale = 1.0 / (C ** 0.5)
    wqkv = jax.random.normal(kw1, (C, 3 * C), dtype=jnp.float32) * scale
    wout = jax.random.normal(kw2, (C, C), dtype=jnp.float32) * scale
    if bias_2d:
        bqkv = jax.random.normal(kb1, (1, 3 * C), dtype=jnp.float32) * 0.01
        bout = jax.random.normal(kb2, (1, C), dtype=jnp.float32) * 0.01
    else:  # PyTorch-style 1-D biases
        bqkv = jax.random.normal(kb1, (3 * C,), dtype=jnp.float32) * 0.01
        bout = jax.random.normal(kb2, (C,), dtype=jnp.float32) * 0.01

    y = altan_attention(x, wqkv, bqkv, wout, bout, n_head=n_head)
    y = jax.block_until_ready(y)

    y_ref = _reference(x, wqkv, bqkv, wout, bout, n_head=n_head)
    assert y.shape == (B, C, H, W)
    # Tolerance accounts for default TPU matmul precision differences.
    assert jnp.allclose(y, y_ref, atol=2e-3, rtol=2e-3), (
        float(jnp.max(jnp.abs(y - y_ref))))


if __name__ == "__main__":
    key = jax.random.PRNGKey(0)
    k1, k2 = jax.random.split(key)

    # Case 1: module default, single head (B=2, C=8, H=W=16 -> S=256).
    _run_case(k1, B=2, C=8, H=16, W=16, n_head=1, bias_2d=True)

    # Case 2: multi-head path with sublane-aligned head dim (C=16, n_head=2).
    _run_case(k2, B=2, C=16, H=16, W=16, n_head=2, bias_2d=False)

    print("KERNEL_OK")
</pallas_src>

<mosaic_0001>
module attributes {stable_mosaic.version = 11 : i64} {
  func.func @_attention_kernel(%arg0: i32, %arg1: memref<2x8x256xf32, #tpu.memory_space<vmem>>, %arg2: memref<24x8xf32, #tpu.memory_space<vmem>>, %arg3: memref<24x1xf32, #tpu.memory_space<vmem>>, %arg4: memref<8x8xf32, #tpu.memory_space<vmem>>, %arg5: memref<8x1xf32, #tpu.memory_space<vmem>>, %arg6: memref<2x8x256xf32, #tpu.memory_space<vmem>>) attributes {dimension_semantics = [#tpu.dimension_semantics<parallel>], iteration_bounds = array<i64: 1>, scalar_prefetch = 0 : i64, scratch_operands = 0 : i64, tpu.core_type = #tpu.core_type<tc>, window_params = [{transform_indices = @transform_0, window_bounds = array<i64: 2, 8, 256>}, {pipeline_mode = #tpu.pipeline_mode<synchronous>, transform_indices = @transform_1, window_bounds = array<i64: 24, 8>}, {pipeline_mode = #tpu.pipeline_mode<synchronous>, transform_indices = @transform_2, window_bounds = array<i64: 24, 1>}, {pipeline_mode = #tpu.pipeline_mode<synchronous>, transform_indices = @transform_3, window_bounds = array<i64: 8, 8>}, {pipeline_mode = #tpu.pipeline_mode<synchronous>, transform_indices = @transform_4, window_bounds = array<i64: 8, 1>}, {transform_indices = @transform_5, window_bounds = array<i64: 2, 8, 256>}]} {
    %cst = arith.constant 1.000000e+00 : f32
    %0 = vector.broadcast %cst : f32 to vector<1x256xf32>
    %c0 = arith.constant 0 : index
    %c0_0 = arith.constant 0 : index
    %c0_1 = arith.constant 0 : index
    %1 = vector.load %arg1[%c0, %c0_0, %c0_1] : memref<2x8x256xf32, #tpu.memory_space<vmem>>, vector<1x8x256xf32>
    %2 = vector.shape_cast %1 : vector<1x8x256xf32> to vector<8x256xf32>
    %c0_2 = arith.constant 0 : index
    %c0_3 = arith.constant 0 : index
    %3 = vector.load %arg2[%c0_2, %c0_3] : memref<24x8xf32, #tpu.memory_space<vmem>>, vector<24x8xf32>
    %cst_4 = arith.constant dense<0.000000e+00> : vector<24x256xf32>
    %4 = tpu.matmul %3, %2, %cst_4 {dimension_numbers = #tpu.dot_dimension_numbers<[1], [0], [0], [1], [0, 0, 1, 1], [], []>} : vector<24x8xf32>, vector<8x256xf32>, vector<24x256xf32> -> vector<24x256xf32>
    %c0_5 = arith.constant 0 : index
    %c0_6 = arith.constant 0 : index
    %5 = vector.load %arg3[%c0_5, %c0_6] : memref<24x1xf32, #tpu.memory_space<vmem>>, vector<24x1xf32>
    %6 = vector.broadcast %5 : vector<24x1xf32> to vector<24x256xf32>
    %7 = arith.addf %4, %6 : vector<24x256xf32>
    %8 = vector.extract_strided_slice %7 {offsets = [0, 0], sizes = [8, 128], strides = [1, 1]} : vector<24x256xf32> to vector<8x128xf32>
    %9 = vector.extract_strided_slice %7 {offsets = [8, 0], sizes = [8, 256], strides = [1, 1]} : vector<24x256xf32> to vector<8x256xf32>
    %10 = vector.extract_strided_slice %7 {offsets = [16, 0], sizes = [8, 256], strides = [1, 1]} : vector<24x256xf32> to vector<8x256xf32>
    %cst_7 = arith.constant dense<0.000000e+00> : vector<128x256xf32>
    %11 = tpu.matmul %8, %9, %cst_7 {dimension_numbers = #tpu.dot_dimension_numbers<[0], [0], [1], [1], [0, 1, 1, 1], [], []>} : vector<8x128xf32>, vector<8x256xf32>, vector<128x256xf32> -> vector<128x256xf32>
    %cst_8 = arith.constant dense<0xFF800000> : vector<128xf32>
    %12 = vector.multi_reduction <maximumf>, %11, %cst_8 [1] : vector<128x256xf32> to vector<128xf32>
    %13 = vector.shape_cast %12 : vector<128xf32> to vector<128x1xf32>
    %14 = vector.broadcast %13 : vector<128x1xf32> to vector<128x256xf32>
    %15 = arith.subf %11, %14 : vector<128x256xf32>
    %16 = math.exp %15 : vector<128x256xf32>
    %cst_9 = arith.constant dense<0.000000e+00> : vector<8x128xf32>
    %17 = tpu.matmul %10, %16, %cst_9 {dimension_numbers = #tpu.dot_dimension_numbers<[1], [1], [0], [0], [0, 0, 1, 0], [], []>} : vector<8x256xf32>, vector<128x256xf32>, vector<8x128xf32> -> vector<8x128xf32>
    %cst_10 = arith.constant dense<0.000000e+00> : vector<1x128xf32>
    %18 = tpu.matmul %0, %16, %cst_10 {dimension_numbers = #tpu.dot_dimension_numbers<[1], [1], [0], [0], [0, 0, 1, 0], [], []>} : vector<1x256xf32>, vector<128x256xf32>, vector<1x128xf32> -> vector<1x128xf32>
    %19 = tpu.reciprocal %18 : vector<1x128xf32> -> vector<1x128xf32>
    %20 = vector.broadcast %19 : vector<1x128xf32> to vector<8x128xf32>
    %21 = arith.mulf %17, %20 : vector<8x128xf32>
    %c0_11 = arith.constant 0 : index
    %c0_12 = arith.constant 0 : index
    %22 = vector.load %arg4[%c0_11, %c0_12] : memref<8x8xf32, #tpu.memory_space<vmem>>, vector<8x8xf32>
    %cst_13 = arith.constant dense<0.000000e+00> : vector<8x128xf32>
    %23 = tpu.matmul %22, %21, %cst_13 {dimension_numbers = #tpu.dot_dimension_numbers<[1], [0], [0], [1], [0, 0, 1, 1], [], []>} : vector<8x8xf32>, vector<8x128xf32>, vector<8x128xf32> -> vector<8x128xf32>
    %24 = vector.extract_strided_slice %2 {offsets = [0, 0], sizes = [8, 128], strides = [1, 1]} : vector<8x256xf32> to vector<8x128xf32>
    %c0_14 = arith.constant 0 : index
    %c0_15 = arith.constant 0 : index
    %25 = vector.load %arg5[%c0_14, %c0_15] : memref<8x1xf32, #tpu.memory_space<vmem>>, vector<8x1xf32>
    %26 = vector.broadcast %25 : vector<8x1xf32> to vector<8x128xf32>
    %27 = arith.addf %24, %26 : vector<8x128xf32>
    %28 = arith.addf %27, %23 : vector<8x128xf32>
    %c0_16 = arith.constant 0 : index
    %c0_17 = arith.constant 0 : index
    %c0_18 = arith.constant 0 : index
    %29 = vector.load %arg6[%c0_16, %c0_17, %c0_18] : memref<2x8x256xf32, #tpu.memory_space<vmem>>, vector<1x8x128xf32>
    %30 = vector.shape_cast %29 : vector<1x8x128xf32> to vector<8x128xf32>
    %31 = vector.shape_cast %28 : vector<8x128xf32> to vector<1x8x128xf32>
    tpu.vector_store %arg6[%c0_16, %c0_17, %c0_18], %31 {strides = array<i32>} : memref<2x8x256xf32, #tpu.memory_space<vmem>>, vector<1x8x128xf32>,
    %32 = vector.extract_strided_slice %7 {offsets = [0, 128], sizes = [8, 128], strides = [1, 1]} : vector<24x256xf32> to vector<8x128xf32>
    %33 = vector.extract_strided_slice %7 {offsets = [8, 0], sizes = [8, 256], strides = [1, 1]} : vector<24x256xf32> to vector<8x256xf32>
    %34 = vector.extract_strided_slice %7 {offsets = [16, 0], sizes = [8, 256], strides = [1, 1]} : vector<24x256xf32> to vector<8x256xf32>
    %cst_19 = arith.constant dense<0.000000e+00> : vector<128x256xf32>
    %35 = tpu.matmul %32, %33, %cst_19 {dimension_numbers = #tpu.dot_dimension_numbers<[0], [0], [1], [1], [0, 1, 1, 1], [], []>} : vector<8x128xf32>, vector<8x256xf32>, vector<128x256xf32> -> vector<128x256xf32>
    %cst_20 = arith.constant dense<0xFF800000> : vector<128xf32>
    %36 = vector.multi_reduction <maximumf>, %35, %cst_20 [1] : vector<128x256xf32> to vector<128xf32>
    %37 = vector.shape_cast %36 : vector<128xf32> to vector<128x1xf32>
    %38 = vector.broadcast %37 : vector<128x1xf32> to vector<128x256xf32>
    %39 = arith.subf %35, %38 : vector<128x256xf32>
    %40 = math.exp %39 : vector<128x256xf32>
    %cst_21 = arith.constant dense<0.000000e+00> : vector<8x128xf32>
    %41 = tpu.matmul %34, %40, %cst_21 {dimension_numbers = #tpu.dot_dimension_numbers<[1], [1], [0], [0], [0, 0, 1, 0], [], []>} : vector<8x256xf32>, vector<128x256xf32>, vector<8x128xf32> -> vector<8x128xf32>
    %cst_22 = arith.constant dense<0.000000e+00> : vector<1x128xf32>
    %42 = tpu.matmul %0, %40, %cst_22 {dimension_numbers = #tpu.dot_dimension_numbers<[1], [1], [0], [0], [0, 0, 1, 0], [], []>} : vector<1x256xf32>, vector<128x256xf32>, vector<1x128xf32> -> vector<1x128xf32>
    %43 = tpu.reciprocal %42 : vector<1x128xf32> -> vector<1x128xf32>
    %44 = vector.broadcast %43 : vector<1x128xf32> to vector<8x128xf32>
    %45 = arith.mulf %41, %44 : vector<8x128xf32>
    %c0_23 = arith.constant 0 : index
    %c0_24 = arith.constant 0 : index
    %46 = vector.load %arg4[%c0_23, %c0_24] : memref<8x8xf32, #tpu.memory_space<vmem>>, vector<8x8xf32>
    %cst_25 = arith.constant dense<0.000000e+00> : vector<8x128xf32>
    %47 = tpu.matmul %46, %45, %cst_25 {dimension_numbers = #tpu.dot_dimension_numbers<[1], [0], [0], [1], [0, 0, 1, 1], [], []>} : vector<8x8xf32>, vector<8x128xf32>, vector<8x128xf32> -> vector<8x128xf32>
    %48 = vector.extract_strided_slice %2 {offsets = [0, 128], sizes = [8, 128], strides = [1, 1]} : vector<8x256xf32> to vector<8x128xf32>
    %c0_26 = arith.constant 0 : index
    %c0_27 = arith.constant 0 : index
    %49 = vector.load %arg5[%c0_26, %c0_27] : memref<8x1xf32, #tpu.memory_space<vmem>>, vector<8x1xf32>
    %50 = vector.broadcast %49 : vector<8x1xf32> to vector<8x128xf32>
    %51 = arith.addf %48, %50 : vector<8x128xf32>
    %52 = arith.addf %51, %47 : vector<8x128xf32>
    %c0_28 = arith.constant 0 : index
    %c0_29 = arith.constant 0 : index
    %c128 = arith.constant 128 : index
    %53 = vector.load %arg6[%c0_28, %c0_29, %c128] : memref<2x8x256xf32, #tpu.memory_space<vmem>>, vector<1x8x128xf32>
    %54 = vector.shape_cast %53 : vector<1x8x128xf32> to vector<8x128xf32>
    %55 = vector.shape_cast %52 : vector<8x128xf32> to vector<1x8x128xf32>
    tpu.vector_store %arg6[%c0_28, %c0_29, %c128], %55 {strides = array<i32>} : memref<2x8x256xf32, #tpu.memory_space<vmem>>, vector<1x8x128xf32>,
    %c1 = arith.constant 1 : index
    %c0_30 = arith.constant 0 : index
    %c0_31 = arith.constant 0 : index
    %56 = vector.load %arg1[%c1, %c0_30, %c0_31] : memref<2x8x256xf32, #tpu.memory_space<vmem>>, vector<1x8x256xf32>
    %57 = vector.shape_cast %56 : vector<1x8x256xf32> to vector<8x256xf32>
    %c0_32 = arith.constant 0 : index
    %c0_33 = arith.constant 0 : index
    %58 = vector.load %arg2[%c0_32, %c0_33] : memref<24x8xf32, #tpu.memory_space<vmem>>, vector<24x8xf32>
    %cst_34 = arith.constant dense<0.000000e+00> : vector<24x256xf32>
    %59 = tpu.matmul %58, %57, %cst_34 {dimension_numbers = #tpu.dot_dimension_numbers<[1], [0], [0], [1], [0, 0, 1, 1], [], []>} : vector<24x8xf32>, vector<8x256xf32>, vector<24x256xf32> -> vector<24x256xf32>
    %c0_35 = arith.constant 0 : index
    %c0_36 = arith.constant 0 : index
    %60 = vector.load %arg3[%c0_35, %c0_36] : memref<24x1xf32, #tpu.memory_space<vmem>>, vector<24x1xf32>
    %61 = vector.broadcast %60 : vector<24x1xf32> to vector<24x256xf32>
    %62 = arith.addf %59, %61 : vector<24x256xf32>
    %63 = vector.extract_strided_slice %62 {offsets = [0, 0], sizes = [8, 128], strides = [1, 1]} : vector<24x256xf32> to vector<8x128xf32>
    %64 = vector.extract_strided_slice %62 {offsets = [8, 0], sizes = [8, 256], strides = [1, 1]} : vector<24x256xf32> to vector<8x256xf32>
    %65 = vector.extract_strided_slice %62 {offsets = [16, 0], sizes = [8, 256], strides = [1, 1]} : vector<24x256xf32> to vector<8x256xf32>
    %cst_37 = arith.constant dense<0.000000e+00> : vector<128x256xf32>
    %66 = tpu.matmul %63, %64, %cst_37 {dimension_numbers = #tpu.dot_dimension_numbers<[0], [0], [1], [1], [0, 1, 1, 1], [], []>} : vector<8x128xf32>, vector<8x256xf32>, vector<128x256xf32> -> vector<128x256xf32>
    %cst_38 = arith.constant dense<0xFF800000> : vector<128xf32>
    %67 = vector.multi_reduction <maximumf>, %66, %cst_38 [1] : vector<128x256xf32> to vector<128xf32>
    %68 = vector.shape_cast %67 : vector<128xf32> to vector<128x1xf32>
    %69 = vector.broadcast %68 : vector<128x1xf32> to vector<128x256xf32>
    %70 = arith.subf %66, %69 : vector<128x256xf32>
    %71 = math.exp %70 : vector<128x256xf32>
    %cst_39 = arith.constant dense<0.000000e+00> : vector<8x128xf32>
    %72 = tpu.matmul %65, %71, %cst_39 {dimension_numbers = #tpu.dot_dimension_numbers<[1], [1], [0], [0], [0, 0, 1, 0], [], []>} : vector<8x256xf32>, vector<128x256xf32>, vector<8x128xf32> -> vector<8x128xf32>
    %cst_40 = arith.constant dense<0.000000e+00> : vector<1x128xf32>
    %73 = tpu.matmul %0, %71, %cst_40 {dimension_numbers = #tpu.dot_dimension_numbers<[1], [1], [0], [0], [0, 0, 1, 0], [], []>} : vector<1x256xf32>, vector<128x256xf32>, vector<1x128xf32> -> vector<1x128xf32>
    %74 = tpu.reciprocal %73 : vector<1x128xf32> -> vector<1x128xf32>
    %75 = vector.broadcast %74 : vector<1x128xf32> to vector<8x128xf32>
    %76 = arith.mulf %72, %75 : vector<8x128xf32>
    %c0_41 = arith.constant 0 : index
    %c0_42 = arith.constant 0 : index
    %77 = vector.load %arg4[%c0_41, %c0_42] : memref<8x8xf32, #tpu.memory_space<vmem>>, vector<8x8xf32>
    %cst_43 = arith.constant dense<0.000000e+00> : vector<8x128xf32>
    %78 = tpu.matmul %77, %76, %cst_43 {dimension_numbers = #tpu.dot_dimension_numbers<[1], [0], [0], [1], [0, 0, 1, 1], [], []>} : vector<8x8xf32>, vector<8x128xf32>, vector<8x128xf32> -> vector<8x128xf32>
    %79 = vector.extract_strided_slice %57 {offsets = [0, 0], sizes = [8, 128], strides = [1, 1]} : vector<8x256xf32> to vector<8x128xf32>
    %c0_44 = arith.constant 0 : index
    %c0_45 = arith.constant 0 : index
    %80 = vector.load %arg5[%c0_44, %c0_45] : memref<8x1xf32, #tpu.memory_space<vmem>>, vector<8x1xf32>
    %81 = vector.broadcast %80 : vector<8x1xf32> to vector<8x128xf32>
    %82 = arith.addf %79, %81 : vector<8x128xf32>
    %83 = arith.addf %82, %78 : vector<8x128xf32>
    %c1_46 = arith.constant 1 : index
    %c0_47 = arith.constant 0 : index
    %c0_48 = arith.constant 0 : index
    %84 = vector.load %arg6[%c1_46, %c0_47, %c0_48] : memref<2x8x256xf32, #tpu.memory_space<vmem>>, vector<1x8x128xf32>
    %85 = vector.shape_cast %84 : vector<1x8x128xf32> to vector<8x128xf32>
    %86 = vector.shape_cast %83 : vector<8x128xf32> to vector<1x8x128xf32>
    tpu.vector_store %arg6[%c1_46, %c0_47, %c0_48], %86 {strides = array<i32>} : memref<2x8x256xf32, #tpu.memory_space<vmem>>, vector<1x8x128xf32>,
    %87 = vector.extract_strided_slice %62 {offsets = [0, 128], sizes = [8, 128], strides = [1, 1]} : vector<24x256xf32> to vector<8x128xf32>
    %88 = vector.extract_strided_slice %62 {offsets = [8, 0], sizes = [8, 256], strides = [1, 1]} : vector<24x256xf32> to vector<8x256xf32>
    %89 = vector.extract_strided_slice %62 {offsets = [16, 0], sizes = [8, 256], strides = [1, 1]} : vector<24x256xf32> to vector<8x256xf32>
    %cst_49 = arith.constant dense<0.000000e+00> : vector<128x256xf32>
    %90 = tpu.matmul %87, %88, %cst_49 {dimension_numbers = #tpu.dot_dimension_numbers<[0], [0], [1], [1], [0, 1, 1, 1], [], []>} : vector<8x128xf32>, vector<8x256xf32>, vector<128x256xf32> -> vector<128x256xf32>
    %cst_50 = arith.constant dense<0xFF800000> : vector<128xf32>
    %91 = vector.multi_reduction <maximumf>, %90, %cst_50 [1] : vector<128x256xf32> to vector<128xf32>
    %92 = vector.shape_cast %91 : vector<128xf32> to vector<128x1xf32>
    %93 = vector.broadcast %92 : vector<128x1xf32> to vector<128x256xf32>
    %94 = arith.subf %90, %93 : vector<128x256xf32>
    %95 = math.exp %94 : vector<128x256xf32>
    %cst_51 = arith.constant dense<0.000000e+00> : vector<8x128xf32>
    %96 = tpu.matmul %89, %95, %cst_51 {dimension_numbers = #tpu.dot_dimension_numbers<[1], [1], [0], [0], [0, 0, 1, 0], [], []>} : vector<8x256xf32>, vector<128x256xf32>, vector<8x128xf32> -> vector<8x128xf32>
    %cst_52 = arith.constant dense<0.000000e+00> : vector<1x128xf32>
    %97 = tpu.matmul %0, %95, %cst_52 {dimension_numbers = #tpu.dot_dimension_numbers<[1], [1], [0], [0], [0, 0, 1, 0], [], []>} : vector<1x256xf32>, vector<128x256xf32>, vector<1x128xf32> -> vector<1x128xf32>
    %98 = tpu.reciprocal %97 : vector<1x128xf32> -> vector<1x128xf32>
    %99 = vector.broadcast %98 : vector<1x128xf32> to vector<8x128xf32>
    %100 = arith.mulf %96, %99 : vector<8x128xf32>
    %c0_53 = arith.constant 0 : index
    %c0_54 = arith.constant 0 : index
    %101 = vector.load %arg4[%c0_53, %c0_54] : memref<8x8xf32, #tpu.memory_space<vmem>>, vector<8x8xf32>
    %cst_55 = arith.constant dense<0.000000e+00> : vector<8x128xf32>
    %102 = tpu.matmul %101, %100, %cst_55 {dimension_numbers = #tpu.dot_dimension_numbers<[1], [0], [0], [1], [0, 0, 1, 1], [], []>} : vector<8x8xf32>, vector<8x128xf32>, vector<8x128xf32> -> vector<8x128xf32>
    %103 = vector.extract_strided_slice %57 {offsets = [0, 128], sizes = [8, 128], strides = [1, 1]} : vector<8x256xf32> to vector<8x128xf32>
    %c0_56 = arith.constant 0 : index
    %c0_57 = arith.constant 0 : index
    %104 = vector.load %arg5[%c0_56, %c0_57] : memref<8x1xf32, #tpu.memory_space<vmem>>, vector<8x1xf32>
    %105 = vector.broadcast %104 : vector<8x1xf32> to vector<8x128xf32>
    %106 = arith.addf %103, %105 : vector<8x128xf32>
    %107 = arith.addf %106, %102 : vector<8x128xf32>
    %c1_58 = arith.constant 1 : index
    %c0_59 = arith.constant 0 : index
    %c128_60 = arith.constant 128 : index
    %108 = vector.load %arg6[%c1_58, %c0_59, %c128_60] : memref<2x8x256xf32, #tpu.memory_space<vmem>>, vector<1x8x128xf32>
    %109 = vector.shape_cast %108 : vector<1x8x128xf32> to vector<8x128xf32>
    %110 = vector.shape_cast %107 : vector<8x128xf32> to vector<1x8x128xf32>
    tpu.vector_store %arg6[%c1_58, %c0_59, %c128_60], %110 {strides = array<i32>} : memref<2x8x256xf32, #tpu.memory_space<vmem>>, vector<1x8x128xf32>,
    return
  }
  func.func @transform_0(%arg0: i32) -> (i32, i32, i32) {
    %c0_i32 = arith.constant 0 : i32
    %c0_i32_0 = arith.constant 0 : i32
    %c0_i32_1 = arith.constant 0 : i32
    return %arg0, %c0_i32, %c0_i32_0 : i32, i32, i32
  }
  func.func @transform_1(%arg0: i32) -> (i32, i32) {
    %c0_i32 = arith.constant 0 : i32
    %c0_i32_0 = arith.constant 0 : i32
    %c0_i32_1 = arith.constant 0 : i32
    return %c0_i32, %c0_i32_0 : i32, i32
  }
  func.func @transform_2(%arg0: i32) -> (i32, i32) {
    %c0_i32 = arith.constant 0 : i32
    %c0_i32_0 = arith.constant 0 : i32
    %c0_i32_1 = arith.constant 0 : i32
    return %c0_i32, %c0_i32_0 : i32, i32
  }
  func.func @transform_3(%arg0: i32) -> (i32, i32) {
    %c0_i32 = arith.constant 0 : i32
    %c0_i32_0 = arith.constant 0 : i32
    %c0_i32_1 = arith.constant 0 : i32
    return %c0_i32, %c0_i32_0 : i32, i32
  }
  func.func @transform_4(%arg0: i32) -> (i32, i32) {
    %c0_i32 = arith.constant 0 : i32
    %c0_i32_0 = arith.constant 0 : i32
    %c0_i32_1 = arith.constant 0 : i32
    return %c0_i32, %c0_i32_0 : i32, i32
  }
  func.func @transform_5(%arg0: i32) -> (i32, i32, i32) {
    %c0_i32 = arith.constant 0 : i32
    %c0_i32_0 = arith.constant 0 : i32
    %c0_i32_1 = arith.constant 0 : i32
    return %arg0, %c0_i32, %c0_i32_0 : i32, i32, i32
  }
}

</mosaic_0001>

<llo_original>
// kernel: tpu_custom_call.1
$region0: #{tpu_custom_call.1}
  #allocation0 [shape = 'u32[]', space=smem, size = 0x4, offset = 0x4, fixed_abs, tag = 'smem constant byte address 0x4 - core index']
  #allocation1 [shape = 'u32[144,128]{1,0:T(1,128)}', space=vmem, size = 0x12000, scoped, tag = 'internal scratch']
  %s0 = inlined_call_operand.vmem [shape: f32[2,8,256], index: 0, kind: input, shape index: {}]
  %s1 = inlined_call_operand.vmem [shape: f32[24,8], index: 1, kind: input, shape index: {}]
  %s2 = inlined_call_operand.vmem [shape: f32[24,1], index: 2, kind: input, shape index: {}]
  %s3 = inlined_call_operand.vmem [shape: f32[8,8], index: 3, kind: input, shape index: {}]
  %s4 = inlined_call_operand.vmem [shape: f32[8,1], index: 4, kind: input, shape index: {}]
  %s5 = inlined_call_operand.hbm [shape: f32[2,8,256], index: 5, kind: output, shape index: {}]
  %s6 = sld [smem:[#allocation0]]
  $region30: #{tpu_custom_call.1} parent=0
    _
  %s8 = ssub.s32 1, %s6
  %s9 = scalar_select 0, %s8, %s6
  $region1: #{tpu_custom_call.1} parent=0
    #allocation2 [shape = 'u8[16384]{0}', space=vmem, size = 0x4000, scoped, tag = 'output window, operand 0, single buffered']
    #allocation3 [shape = 's32[1]{0}', space=sflag, size = 0x4, scoped, tag = 'scoped memory for tpu_custom_call.1']
    %10 = vsyncpa [#allocation3], 0
    // Predicated region
    $region2: #{tpu_custom_call.1} parent=1 // pred_check
      _
    $region3: #{tpu_custom_call.1} parent=1 // pred_check_branch
      %12 = sbr.rel (0) target = $region5
    $region4: #{tpu_custom_call.1} parent=1 // pred_region
      _
    $region5: #{tpu_custom_call.1} parent=1 // pred_fallthru
      _
    // Predicated region
    $region6: #{tpu_custom_call.1} parent=1 // pred_check
      _
    $region7: #{tpu_custom_call.1} parent=1 // pred_check_branch
      %14 = sbr.rel (0) target = $region9
    $region8: #{tpu_custom_call.1} parent=1 // pred_region
      _
    $region9: #{tpu_custom_call.1} parent=1 // pred_fallthru
      _
    // Predicated region
    $region10: #{tpu_custom_call.1} parent=1 // pred_check
      _
    $region11: #{tpu_custom_call.1} parent=1 // pred_check_branch
      %16 = sbr.rel (0) target = $region13
    $region12: #{tpu_custom_call.1} parent=1 // pred_region
      _
    $region13: #{tpu_custom_call.1} parent=1 // pred_fallthru
      _
    // Predicated region
    $region14: #{tpu_custom_call.1} parent=1 // pred_check
      _
    $region15: #{tpu_custom_call.1} parent=1 // pred_check_branch
      %18 = sbr.rel (0) target = $region17
    $region16: #{tpu_custom_call.1} parent=1 // pred_region
      _
    $region17: #{tpu_custom_call.1} parent=1 // pred_fallthru
      _
    // Predicated region
    $region18: #{tpu_custom_call.1} parent=1 // pred_check
      _
    $region19: #{tpu_custom_call.1} parent=1 // pred_check_branch
      %20 = sbr.rel (0) target = $region21
    $region20: #{tpu_custom_call.1} parent=1 // pred_region
      _
    $region21: #{tpu_custom_call.1} parent=1 // pred_fallthru
      _
    %v21 = vld [vmem:[%s0] sm:$0xff]
    %v22 = vld [vmem:[%s0 + $0x8] sm:$0xff]
    %v23 = vld [vmem:[%s1] sm:$0xff]
    %v24 = vld [vmem:[%s1 + $0x8] sm:$0xff]
    %v25 = vld [vmem:[%s1 + $0x10] sm:$0xff]
    %v26 = vld [vmem:[%s2] sm:$0xff]
    %v27 = vld [vmem:[%s2 + $0x8] sm:$0xff]
    %v28 = vld [vmem:[%s2 + $0x10] sm:$0xff]
    %30 = vset.pattern.permute.xlu0 0
    %31 = vperm.xlu0 %30, %v26
    %v32 = vpop.permute.xlu0 %31
    %35 = vset.pattern.permute.xlu0 0
    %36 = vperm.xlu0 %35, %v27
    %v37 = vpop.permute.xlu0 %36
    %40 = vset.pattern.permute.xlu0 0
    %41 = vperm.xlu0 %40, %v28
    %v42 = vpop.permute.xlu0 %41
    %vm44 = vcmask 64512
    %v46 = vsel %vm44, %v23, 0
    %v49 = vsel %vm44, %v24, 0
    %v52 = vsel %vm44, %v25, 0
    %54 = vmatprep.subr.mxu0 %v22
    %55 = vmatpush1.msra.mxu0 %v21
    %56 = vmatprep.subr.mxu0 0.0
    %57 = vmatpush1.msra.mxu0 0.0
    %58 = vmatprep.subr.mxu0 0.0
    %59 = vmatpush1.msra.mxu0 0.0
    %60 = vmatprep.subr.mxu0 0.0
    %61 = vmatpush1.msra.mxu0 0.0
    %62 = vmatprep.subr.mxu0 0.0
    %63 = vmatpush1.msra.mxu0 0.0
    %64 = vmatprep.subr.mxu0 0.0
    %65 = vmatpush1.msra.mxu0 0.0
    %66 = vmatprep.subr.mxu0 0.0
    %67 = vmatpush1.msra.mxu0 0.0
    %68 = vmatprep.subr.mxu0 0.0
    %69 = vmatpush1.msra.mxu0 0.0
    %70 = vmatprep.subr.mxu0 0.0
    %71 = vmatpush1.msra.mxu0 0.0
    %72 = vmatprep.subr.mxu0 0.0
    %73 = vmatpush1.msra.mxu0 0.0
    %74 = vmatprep.subr.mxu0 0.0
    %75 = vmatpush1.msra.mxu0 0.0
    %76 = vmatprep.subr.mxu0 0.0
    %77 = vmatpush1.msra.mxu0 0.0
    %78 = vmatprep.subr.mxu0 0.0
    %79 = vmatpush1.msra.mxu0 0.0
    %80 = vmatprep.subr.mxu0 0.0
    %81 = vmatpush1.msra.mxu0 0.0
    %82 = vmatprep.subr.mxu0 0.0
    %83 = vmatpush1.msra.mxu0 0.0
    %84 = vmatprep.subr.mxu0 0.0
    %85 = vmatpush1.msra.mxu0 0.0
    %86 = vmatprep.subr.mxu0 0.0
    %87 = vmatpush1.msra.mxu0 0.0
    %88 = vmatprep.subr.mxu0 0.0
    %89 = vmatpush1.msra.mxu0 0.0
    %90 = vmatprep.subr.mxu0 0.0
    %91 = vmatpush1.msra.mxu0 0.0
    %92 = vmatprep.subr.mxu0 0.0
    %93 = vmatpush1.msra.mxu0 0.0
    %94 = vmatprep.subr.mxu0 0.0
    %95 = vmatpush1.msra.mxu0 0.0
    %96 = vmatprep.subr.mxu0 0.0
    %97 = vmatpush1.msra.mxu0 0.0
    %98 = vmatprep.subr.mxu0 0.0
    %99 = vmatpush1.msra.mxu0 0.0
    %100 = vmatprep.subr.mxu0 0.0
    %101 = vmatpush1.msra.mxu0 0.0
    %102 = vmatprep.subr.mxu0 0.0
    %103 = vmatpush1.msra.mxu0 0.0
    %104 = vmatprep.subr.mxu0 0.0
    %105 = vmatpush1.msra.mxu0 0.0
    %106 = vmatprep.subr.mxu0 0.0
    %107 = vmatpush1.msra.mxu0 0.0
    %108 = vmatprep.subr.mxu0 0.0
    %109 = vmatpush1.msra.mxu0 0.0
    %110 = vmatprep.subr.mxu0 0.0
    %111 = vmatpush1.msra.mxu0 0.0
    %112 = vmatprep.subr.mxu0 0.0
    %113 = vmatpush1.msra.mxu0 0.0
    %114 = vmatprep.subr.mxu0 0.0
    %115 = vmatpush1.msra.mxu0 0.0
    %116 = vmatprep.subr.mxu0 0.0
    %117 = vmatpush1.msra.mxu0 0.0
    %118 = vmatprep.mubr.f32.mxu0 0.0
    %119 = vmatmul.mubr.f32.gmra.mrb[0].mxu0 %v46
    %v120 = vpop.f32.mrb[0].mxu0
    %v121 = vadd.f32 %v32, %v120
    %v122 = vpop.f32.mrb[0].mxu0
    %v123 = vadd.f32 %v32, %v122
    %124 = vmatprep.mubr.f32.mxu0 0.0
    %125 = vmatmul.mubr.f32.gmra.mrb[0].mxu0 %v49
    %v126 = vpop.f32.mrb[0].mxu0
    %v127 = vadd.f32 %v37, %v126
    %v128 = vpop.f32.mrb[0].mxu0
    %v129 = vadd.f32 %v37, %v128
    %130 = vmatprep.mubr.f32.mxu0 0.0
    %131 = vmatmul.mubr.f32.gmra.mrb[0].mxu0 %v52
    %v132 = vpop.f32.mrb[0].mxu0
    %v133 = vadd.f32 %v42, %v132
    %v134 = vpop.f32.mrb[0].mxu0
    %v135 = vadd.f32 %v42, %v134
    %136 = vdwg.mxu0
    %137 = vxpose.xlu0.b32.start [1/16] %v121, 128
    %138 = vxpose.xlu0.b32.cont [2/16] 0.0, 128
    %139 = vxpose.xlu0.b32.cont [3/16] 0.0, 128
    %140 = vxpose.xlu0.b32.cont [4/16] 0.0, 128
    %141 = vxpose.xlu0.b32.cont [5/16] 0.0, 128
    %142 = vxpose.xlu0.b32.cont [6/16] 0.0, 128
    %143 = vxpose.xlu0.b32.cont [7/16] 0.0, 128
    %144 = vxpose.xlu0.b32.cont [8/16] 0.0, 128
    %145 = vxpose.xlu0.b32.cont [9/16] 0.0, 128
    %146 = vxpose.xlu0.b32.cont [10/16] 0.0, 128
    %147 = vxpose.xlu0.b32.cont [11/16] 0.0, 128
    %148 = vxpose.xlu0.b32.cont [12/16] 0.0, 128
    %149 = vxpose.xlu0.b32.cont [13/16] 0.0, 128
    %150 = vxpose.xlu0.b32.cont [14/16] 0.0, 128
    %151 = vxpose.xlu0.b32.cont [15/16] 0.0, 128
    %152 = vxpose.xlu0.b32.end [16/16] 0.0, 128
    %v153 = vpop.trf.xlu0
    %v154 = vpop.trf.xlu0
    %v155 = vpop.trf.xlu0
    %v156 = vpop.trf.xlu0
    %v157 = vpop.trf.xlu0
    %v158 = vpop.trf.xlu0
    %v159 = vpop.trf.xlu0
    %v160 = vpop.trf.xlu0
    %v161 = vpop.trf.xlu0
    %v162 = vpop.trf.xlu0
    %v163 = vpop.trf.xlu0
    %v164 = vpop.trf.xlu0
    %v165 = vpop.trf.xlu0
    %v166 = vpop.trf.xlu0
    %v167 = vpop.trf.xlu0
    %v168 = vpop.trf.xlu0
    %v170 = vsel %vm44, %v153, 0
    %v173 = vsel %vm44, %v154, 0
    %v176 = vsel %vm44, %v155, 0
    %v179 = vsel %vm44, %v156, 0
    %v182 = vsel %vm44, %v157, 0
    %v185 = vsel %vm44, %v158, 0
    %v188 = vsel %vm44, %v159, 0
    %v191 = vsel %vm44, %v160, 0
    %v194 = vsel %vm44, %v161, 0
    %v197 = vsel %vm44, %v162, 0
    %v200 = vsel %vm44, %v163, 0
    %v203 = vsel %vm44, %v164, 0
    %v206 = vsel %vm44, %v165, 0
    %v209 = vsel %vm44, %v166, 0
    %v212 = vsel %vm44, %v167, 0
    %v215 = vsel %vm44, %v168, 0
    %217 = vmatprep.subr.mxu0 %v129
    %218 = vmatpush1.msra.mxu0 %v127
    %219 = vmatprep.subr.mxu0 0.0
    %220 = vmatpush1.msra.mxu0 0.0
    %221 = vmatprep.subr.mxu0 0.0
    %222 = vmatpush1.msra.mxu0 0.0
    %223 = vmatprep.subr.mxu0 0.0
    %224 = vmatpush1.msra.mxu0 0.0
    %225 = vmatprep.subr.mxu0 0.0
    %226 = vmatpush1.msra.mxu0 0.0
    %227 = vmatprep.subr.mxu0 0.0
    %228 = vmatpush1.msra.mxu0 0.0
    %229 = vmatprep.subr.mxu0 0.0
    %230 = vmatpush1.msra.mxu0 0.0
    %231 = vmatprep.subr.mxu0 0.0
    %232 = vmatpush1.msra.mxu0 0.0
    %233 = vmatprep.subr.mxu0 0.0
    %234 = vmatpush1.msra.mxu0 0.0
    %235 = vmatprep.subr.mxu0 0.0
    %236 = vmatpush1.msra.mxu0 0.0
    %237 = vmatprep.subr.mxu0 0.0
    %238 = vmatpush1.msra.mxu0 0.0
    %239 = vmatprep.subr.mxu0 0.0
    %240 = vmatpush1.msra.mxu0 0.0
    %241 = vmatprep.subr.mxu0 0.0
    %242 = vmatpush1.msra.mxu0 0.0
    %243 = vmatprep.subr.mxu0 0.0
    %244 = vmatpush1.msra.mxu0 0.0
    %245 = vmatprep.subr.mxu0 0.0
    %246 = vmatpush1.msra.mxu0 0.0
    %247 = vmatprep.subr.mxu0 0.0
    %248 = vmatpush1.msra.mxu0 0.0
    %249 = vmatprep.subr.mxu0 0.0
    %250 = vmatpush1.msra.mxu0 0.0
    %251 = vmatprep.subr.mxu0 0.0
    %252 = vmatpush1.msra.mxu0 0.0
    %253 = vmatprep.subr.mxu0 0.0
    %254 = vmatpush1.msra.mxu0 0.0
    %255 = vmatprep.subr.mxu0 0.0
    %256 = vmatpush1.msra.mxu0 0.0
    %257 = vmatprep.subr.mxu0 0.0
    %258 = vmatpush1.msra.mxu0 0.0
    %259 = vmatprep.subr.mxu0 0.0
    %260 = vmatpush1.msra.mxu0 0.0
    %261 = vmatprep.subr.mxu0 0.0
    %262 = vmatpush1.msra.mxu0 0.0
    %263 = vmatprep.subr.mxu0 0.0
    %264 = vmatpush1.msra.mxu0 0.0
    %265 = vmatprep.subr.mxu0 0.0
    %266 = vmatpush1.msra.mxu0 0.0
    %267 = vmatprep.subr.mxu0 0.0
    %268 = vmatpush1.msra.mxu0 0.0
    %269 = vmatprep.subr.mxu0 0.0
    %270 = vmatpush1.msra.mxu0 0.0
    %271 = vmatprep.subr.mxu0 0.0
    %272 = vmatpush1.msra.mxu0 0.0
    %273 = vmatprep.subr.mxu0 0.0
    %274 = vmatpush1.msra.mxu0 0.0
    %275 = vmatprep.subr.mxu0 0.0
    %276 = vmatpush1.msra.mxu0 0.0
    %277 = vmatprep.subr.mxu0 0.0
    %278 = vmatpush1.msra.mxu0 0.0
    %279 = vmatprep.subr.mxu0 0.0
    %280 = vmatpush1.msra.mxu0 0.0
    %281 = vmatprep.mubr.f32.mxu0 0.0
    %282 = vmatmul.mubr.f32.gmra.mrb[0].mxu0 %v170
    %v283 = vpop.f32.mrb[0].mxu0
    %v284 = vadd.f32 0.0, %v283
    %v285 = vpop.f32.mrb[0].mxu0
    %v286 = vadd.f32 0.0, %v285
    %287 = vmatprep.mubr.f32.mxu0 0.0
    %288 = vmatmul.mubr.f32.gmra.mrb[0].mxu0 %v173
    %v289 = vpop.f32.mrb[0].mxu0
    %v290 = vadd.f32 0.0, %v289
    %v291 = vpop.f32.mrb[0].mxu0
    %v292 = vadd.f32 0.0, %v291
    %293 = vmatprep.mubr.f32.mxu0 0.0
    %294 = vmatmul.mubr.f32.gmra.mrb[0].mxu0 %v176
    %v295 = vpop.f32.mrb[0].mxu0
    %v296 = vadd.f32 0.0, %v295
    %v297 = vpop.f32.mrb[0].mxu0
    %v298 = vadd.f32 0.0, %v297
    %299 = vmatprep.mubr.f32.mxu0 0.0
    %300 = vmatmul.mubr.f32.gmra.mrb[0].mxu0 %v179
    %v301 = vpop.f32.mrb[0].mxu0
    %v302 = vadd.f32 0.0, %v301
    %v303 = vpop.f32.mrb[0].mxu0
    %v304 = vadd.f32 0.0, %v303
    %305 = vmatprep.mubr.f32.mxu0 0.0
    %306 = vmatmul.mubr.f32.gmra.mrb[0].mxu0 %v182
    %v307 = vpop.f32.mrb[0].mxu0
    %v308 = vadd.f32 0.0, %v307
    %v309 = vpop.f32.mrb[0].mxu0
    %v310 = vadd.f32 0.0, %v309
    %311 = vmatprep.mubr.f32.mxu0 0.0
    %312 = vmatmul.mubr.f32.gmra.mrb[0].mxu0 %v185
    %v313 = vpop.f32.mrb[0].mxu0
    %v314 = vadd.f32 0.0, %v313
    %v315 = vpop.f32.mrb[0].mxu0
    %v316 = vadd.f32 0.0, %v315
    %317 = vmatprep.mubr.f32.mxu0 0.0
    %318 = vmatmul.mubr.f32.gmra.mrb[0].mxu0 %v188
    %v319 = vpop.f32.mrb[0].mxu0
    %v320 = vadd.f32 0.0, %v319
    %v321 = vpop.f32.mrb[0].mxu0
    %v322 = vadd.f32 0.0, %v321
    %323 = vmatprep.mubr.f32.mxu0 0.0
    %324 = vmatmul.mubr.f32.gmra.mrb[0].mxu0 %v191
    %v325 = vpop.f32.mrb[0].mxu0
    %v326 = vadd.f32 0.0, %v325
    %v327 = vpop.f32.mrb[0].mxu0
    %v328 = vadd.f32 0.0, %v327
    %329 = vmatprep.mubr.f32.mxu0 0.0
    %330 = vmatmul.mubr.f32.gmra.mrb[0].mxu0 %v194
    %v331 = vpop.f32.mrb[0].mxu0
    %v332 = vadd.f32 0.0, %v331
    %v333 = vpop.f32.mrb[0].mxu0
    %v334 = vadd.f32 0.0, %v333
    %335 = vmatprep.mubr.f32.mxu0 0.0
    %336 = vmatmul.mubr.f32.gmra.mrb[0].mxu0 %v197
    %v337 = vpop.f32.mrb[0].mxu0
    %v338 = vadd.f32 0.0, %v337
    %v339 = vpop.f32.mrb[0].mxu0
    %v340 = vadd.f32 0.0, %v339
    %341 = vmatprep.mubr.f32.mxu0 0.0
    %342 = vmatmul.mubr.f32.gmra.mrb[0].mxu0 %v200
    %v343 = vpop.f32.mrb[0].mxu0
    %v344 = vadd.f32 0.0, %v343
    %v345 = vpop.f32.mrb[0].mxu0
    %v346 = vadd.f32 0.0, %v345
    %347 = vmatprep.mubr.f32.mxu0 0.0
    %348 = vmatmul.mubr.f32.gmra.mrb[0].mxu0 %v203
    %v349 = vpop.f32.mrb[0].mxu0
    %v350 = vadd.f32 0.0, %v349
    %v351 = vpop.f32.mrb[0].mxu0
    %v352 = vadd.f32 0.0, %v351
    %353 = vmatprep.mubr.f32.mxu0 0.0
    %354 = vmatmul.mubr.f32.gmra.mrb[0].mxu0 %v206
    %v355 = vpop.f32.mrb[0].mxu0
    %v356 = vadd.f32 0.0, %v355
    %v357 = vpop.f32.mrb[0].mxu0
    %v358 = vadd.f32 0.0, %v357
    %359 = vmatprep.mubr.f32.mxu0 0.0
    %360 = vmatmul.mubr.f32.gmra.mrb[0].mxu0 %v209
    %v361 = vpop.f32.mrb[0].mxu0
    %v362 = vadd.f32 0.0, %v361
    %v363 = vpop.f32.mrb[0].mxu0
    %v364 = vadd.f32 0.0, %v363
    %365 = vmatprep.mubr.f32.mxu0 0.0
    %366 = vmatmul.mubr.f32.gmra.mrb[0].mxu0 %v212
    %v367 = vpop.f32.mrb[0].mxu0
    %v368 = vadd.f32 0.0, %v367
    %v369 = vpop.f32.mrb[0].mxu0
    %v370 = vadd.f32 0.0, %v369
    %371 = vmatprep.mubr.f32.mxu0 0.0
    %372 = vmatmul.mubr.f32.gmra.mrb[0].mxu0 %v215
    %v373 = vpop.f32.mrb[0].mxu0
    %v374 = vadd.f32 0.0, %v373
    %v375 = vpop.f32.mrb[0].mxu0
    %v376 = vadd.f32 0.0, %v375
    %377 = vdwg.mxu0
    %v378 = vmax.f32 %v284, %v286
    %379 = vmax.xlane.f32.xlu0 %v378
    %v380 = vpop.xlane.xlu0 %379
    %v381 = vmax.f32 %v290, %v292
    %382 = vmax.xlane.f32.xlu0 %v381
    %v383 = vpop.xlane.xlu0 %382
    %v384 = vmax.f32 %v296, %v298
    %385 = vmax.xlane.f32.xlu0 %v384
    %v386 = vpop.xlane.xlu0 %385
    %v387 = vmax.f32 %v302, %v304
    %388 = vmax.xlane.f32.xlu0 %v387
    %v389 = vpop.xlane.xlu0 %388
    %v390 = vmax.f32 %v308, %v310
    %391 = vmax.xlane.f32.xlu0 %v390
    %v392 = vpop.xlane.xlu0 %391
    %v393 = vmax.f32 %v314, %v316
    %394 = vmax.xlane.f32.xlu0 %v393
    %v395 = vpop.xlane.xlu0 %394
    %v396 = vmax.f32 %v320, %v322
    %397 = vmax.xlane.f32.xlu0 %v396
    %v398 = vpop.xlane.xlu0 %397
    %v399 = vmax.f32 %v326, %v328
    %400 = vmax.xlane.f32.xlu0 %v399
    %v401 = vpop.xlane.xlu0 %400
    %v402 = vmax.f32 %v332, %v334
    %403 = vmax.xlane.f32.xlu0 %v402
    %v404 = vpop.xlane.xlu0 %403
    %v405 = vmax.f32 %v338, %v340
    %406 = vmax.xlane.f32.xlu0 %v405
    %v407 = vpop.xlane.xlu0 %406
    %v408 = vmax.f32 %v344, %v346
    %409 = vmax.xlane.f32.xlu0 %v408
    %v410 = vpop.xlane.xlu0 %409
    %v411 = vmax.f32 %v350, %v352
    %412 = vmax.xlane.f32.xlu0 %v411
    %v413 = vpop.xlane.xlu0 %412
    %v414 = vmax.f32 %v356, %v358
    %415 = vmax.xlane.f32.xlu0 %v414
    %v416 = vpop.xlane.xlu0 %415
    %v417 = vmax.f32 %v362, %v364
    %418 = vmax.xlane.f32.xlu0 %v417
    %v419 = vpop.xlane.xlu0 %418
    %v420 = vmax.f32 %v368, %v370
    %421 = vmax.xlane.f32.xlu0 %v420
    %v422 = vpop.xlane.xlu0 %421
    %v423 = vmax.f32 %v374, %v376
    %424 = vmax.xlane.f32.xlu0 %v423
    %v425 = vpop.xlane.xlu0 %424
    %v426 = vsub.f32 %v284, %v380
    %v427 = vsub.f32 %v286, %v380
    %v428 = vsub.f32 %v290, %v383
    %v429 = vsub.f32 %v292, %v383
    %v430 = vsub.f32 %v296, %v386
    %v431 = vsub.f32 %v298, %v386
    %v432 = vsub.f32 %v302, %v389
    %v433 = vsub.f32 %v304, %v389
    %v434 = vsub.f32 %v308, %v392
    %v435 = vsub.f32 %v310, %v392
    %v436 = vsub.f32 %v314, %v395
    %v437 = vsub.f32 %v316, %v395
    %v438 = vsub.f32 %v320, %v398
    %v439 = vsub.f32 %v322, %v398
    %v440 = vsub.f32 %v326, %v401
    %v441 = vsub.f32 %v328, %v401
    %v442 = vsub.f32 %v332, %v404
    %v443 = vsub.f32 %v334, %v404
    %v444 = vsub.f32 %v338, %v407
    %v445 = vsub.f32 %v340, %v407
    %v446 = vsub.f32 %v344, %v410
    %v447 = vsub.f32 %v346, %v410
    %v448 = vsub.f32 %v350, %v413
    %v449 = vsub.f32 %v352, %v413
    %v450 = vsub.f32 %v356, %v416
    %v451 = vsub.f32 %v358, %v416
    %v452 = vsub.f32 %v362, %v419
    %v453 = vsub.f32 %v364, %v419
    %v454 = vsub.f32 %v368, %v422
    %v455 = vsub.f32 %v370, %v422
    %v456 = vsub.f32 %v374, %v425
    %v457 = vsub.f32 %v376, %v425
    %v458 = vmul.f32 %v426, 1.442695
    %v459 = vpow.pop %v458
    %v460 = vmul.f32 %v427, 1.442695
    %v461 = vpow.pop %v460
    %v462 = vmul.f32 %v428, 1.442695
    %v463 = vpow.pop %v462
    %v464 = vmul.f32 %v429, 1.442695
    %v465 = vpow.pop %v464
    %v466 = vmul.f32 %v430, 1.442695
    %v467 = vpow.pop %v466
    %v468 = vmul.f32 %v431, 1.442695
    %v469 = vpow.pop %v468
    %v470 = vmul.f32 %v432, 1.442695
    %v471 = vpow.pop %v470
    %v472 = vmul.f32 %v433, 1.442695
    %v473 = vpow.pop %v472
    %v474 = vmul.f32 %v434, 1.442695
    %v475 = vpow.pop %v474
    %v476 = vmul.f32 %v435, 1.442695
    %v477 = vpow.pop %v476
    %v478 = vmul.f32 %v436, 1.442695
    %v479 = vpow.pop %v478
    %v480 = vmul.f32 %v437, 1.442695
    %v481 = vpow.pop %v480
    %v482 = vmul.f32 %v438, 1.442695
    %v483 = vpow.pop %v482
    %v484 = vmul.f32 %v439, 1.442695
    %v485 = vpow.pop %v484
    %v486 = vmul.f32 %v440, 1.442695
    %v487 = vpow.pop %v486
    %v488 = vmul.f32 %v441, 1.442695
    %v489 = vpow.pop %v488
    %v490 = vmul.f32 %v442, 1.442695
    %v491 = vpow.pop %v490
    %v492 = vmul.f32 %v443, 1.442695
    %v493 = vpow.pop %v492
    %v494 = vmul.f32 %v444, 1.442695
    %v495 = vpow.pop %v494
    %v496 = vmul.f32 %v445, 1.442695
    %v497 = vpow.pop %v496
    %v498 = vmul.f32 %v446, 1.442695
    %v499 = vpow.pop %v498
    %v500 = vmul.f32 %v447, 1.442695
    %v501 = vpow.pop %v500
    %v502 = vmul.f32 %v448, 1.442695
    %v503 = vpow.pop %v502
    %v504 = vmul.f32 %v449, 1.442695
    %v505 = vpow.pop %v504
    %v506 = vmul.f32 %v450, 1.442695
    %v507 = vpow.pop %v506
    %v508 = vmul.f32 %v451, 1.442695
    %v509 = vpow.pop %v508
    %v510 = vmul.f32 %v452, 1.442695
    %v511 = vpow.pop %v510
    %v512 = vmul.f32 %v453, 1.442695
    %v513 = vpow.pop %v512
    %v514 = vmul.f32 %v454, 1.442695
    %v515 = vpow.pop %v514
    %v516 = vmul.f32 %v455, 1.442695
    %v517 = vpow.pop %v516
    %v518 = vmul.f32 %v456, 1.442695
    %v519 = vpow.pop %v518
    %v520 = vmul.f32 %v457, 1.442695
    %v521 = vpow.pop %v520
    %522 = vmatprep.subr.mxu0 %v461
    %523 = vmatpush1.xpose.msra.mxu0 %v459
    %524 = vmatprep.subr.mxu0 %v465
    %525 = vmatpush1.xpose.msra.mxu0 %v463
    %526 = vmatprep.subr.mxu0 %v469
    %527 = vmatpush1.xpose.msra.mxu0 %v467
    %528 = vmatprep.subr.mxu0 %v473
    %529 = vmatpush1.xpose.msra.mxu0 %v471
    %530 = vmatprep.subr.mxu0 %v477
    %531 = vmatpush1.xpose.msra.mxu0 %v475
    %532 = vmatprep.subr.mxu0 %v481
    %533 = vmatpush1.xpose.msra.mxu0 %v479
    %534 = vmatprep.subr.mxu0 %v485
    %535 = vmatpush1.xpose.msra.mxu0 %v483
    %536 = vmatprep.subr.mxu0 %v489
    %537 = vmatpush1.xpose.msra.mxu0 %v487
    %538 = vmatprep.subr.mxu0 %v493
    %539 = vmatpush1.xpose.msra.mxu0 %v491
    %540 = vmatprep.subr.mxu0 %v497
    %541 = vmatpush1.xpose.msra.mxu0 %v495
    %542 = vmatprep.subr.mxu0 %v501
    %543 = vmatpush1.xpose.msra.mxu0 %v499
    %544 = vmatprep.subr.mxu0 %v505
    %545 = vmatpush1.xpose.msra.mxu0 %v503
    %546 = vmatprep.subr.mxu0 %v509
    %547 = vmatpush1.xpose.msra.mxu0 %v507
    %548 = vmatprep.subr.mxu0 %v513
    %549 = vmatpush1.xpose.msra.mxu0 %v511
    %550 = vmatprep.subr.mxu0 %v517
    %551 = vmatpush1.xpose.msra.mxu0 %v515
    %552 = vmatprep.subr.mxu0 %v521
    %553 = vmatpush1.xpose.msra.mxu0 %v519
    %554 = vmatprep.subr.mxu0 0.0
    %555 = vmatpush1.xpose.msra.mxu0 0.0
    %556 = vmatprep.subr.mxu0 0.0
    %557 = vmatpush1.xpose.msra.mxu0 0.0
    %558 = vmatprep.subr.mxu0 0.0
    %559 = vmatpush1.xpose.msra.mxu0 0.0
    %560 = vmatprep.subr.mxu0 0.0
    %561 = vmatpush1.xpose.msra.mxu0 0.0
    %562 = vmatprep.subr.mxu0 0.0
    %563 = vmatpush1.xpose.msra.mxu0 0.0
    %564 = vmatprep.subr.mxu0 0.0
    %565 = vmatpush1.xpose.msra.mxu0 0.0
    %566 = vmatprep.subr.mxu0 0.0
    %567 = vmatpush1.xpose.msra.mxu0 0.0
    %568 = vmatprep.subr.mxu0 0.0
    %569 = vmatpush1.xpose.msra.mxu0 0.0
    %570 = vmatprep.subr.mxu0 0.0
    %571 = vmatpush1.xpose.msra.mxu0 0.0
    %572 = vmatprep.subr.mxu0 0.0
    %573 = vmatpush1.xpose.msra.mxu0 0.0
    %574 = vmatprep.subr.mxu0 0.0
    %575 = vmatpush1.xpose.msra.mxu0 0.0
    %576 = vmatprep.subr.mxu0 0.0
    %577 = vmatpush1.xpose.msra.mxu0 0.0
    %578 = vmatprep.subr.mxu0 0.0
    %579 = vmatpush1.xpose.msra.mxu0 0.0
    %580 = vmatprep.subr.mxu0 0.0
    %581 = vmatpush1.xpose.msra.mxu0 0.0
    %582 = vmatprep.subr.mxu0 0.0
    %583 = vmatpush1.xpose.msra.mxu0 0.0
    %584 = vmatprep.subr.mxu0 0.0
    %585 = vmatpush1.xpose.msra.mxu0 0.0
    %586 = vmatprep.mubr.f32.mxu0 %v135
    %587 = vmatmul.mubr.f32.gmra.mrb[0].mxu0 %v133
    %v588 = vpop.f32.mrb[0].mxu0
    %v589 = vadd.f32 0.0, %v588
    %v590 = vpop.f32.mrb[0].mxu0
    %591 = vdwg.mxu0
    %592 = vmatprep.subr.mxu0 %v461
    %593 = vmatpush1.xpose.msra.mxu0 %v459
    %594 = vmatprep.subr.mxu0 %v465
    %595 = vmatpush1.xpose.msra.mxu0 %v463
    %596 = vmatprep.subr.mxu0 %v469
    %597 = vmatpush1.xpose.msra.mxu0 %v467
    %598 = vmatprep.subr.mxu0 %v473
    %599 = vmatpush1.xpose.msra.mxu0 %v471
    %600 = vmatprep.subr.mxu0 %v477
    %601 = vmatpush1.xpose.msra.mxu0 %v475
    %602 = vmatprep.subr.mxu0 %v481
    %603 = vmatpush1.xpose.msra.mxu0 %v479
    %604 = vmatprep.subr.mxu0 %v485
    %605 = vmatpush1.xpose.msra.mxu0 %v483
    %606 = vmatprep.subr.mxu0 %v489
    %607 = vmatpush1.xpose.msra.mxu0 %v487
    %608 = vmatprep.subr.mxu0 %v493
    %609 = vmatpush1.xpose.msra.mxu0 %v491
    %610 = vmatprep.subr.mxu0 %v497
    %611 = vmatpush1.xpose.msra.mxu0 %v495
    %612 = vmatprep.subr.mxu0 %v501
    %613 = vmatpush1.xpose.msra.mxu0 %v499
    %614 = vmatprep.subr.mxu0 %v505
    %615 = vmatpush1.xpose.msra.mxu0 %v503
    %616 = vmatprep.subr.mxu0 %v509
    %617 = vmatpush1.xpose.msra.mxu0 %v507
    %618 = vmatprep.subr.mxu0 %v513
    %619 = vmatpush1.xpose.msra.mxu0 %v511
    %620 = vmatprep.subr.mxu0 %v517
    %621 = vmatpush1.xpose.msra.mxu0 %v515
    %622 = vmatprep.subr.mxu0 %v521
    %623 = vmatpush1.xpose.msra.mxu0 %v519
    %624 = vmatprep.subr.mxu0 0.0
    %625 = vmatpush1.xpose.msra.mxu0 0.0
    %626 = vmatprep.subr.mxu0 0.0
    %627 = vmatpush1.xpose.msra.mxu0 0.0
    %628 = vmatprep.subr.mxu0 0.0
    %629 = vmatpush1.xpose.msra.mxu0 0.0
    %630 = vmatprep.subr.mxu0 0.0
    %631 = vmatpush1.xpose.msra.mxu0 0.0
    %632 = vmatprep.subr.mxu0 0.0
    %633 = vmatpush1.xpose.msra.mxu0 0.0
    %634 = vmatprep.subr.mxu0 0.0
    %635 = vmatpush1.xpose.msra.mxu0 0.0
    %636 = vmatprep.subr.mxu0 0.0
    %637 = vmatpush1.xpose.msra.mxu0 0.0
    %638 = vmatprep.subr.mxu0 0.0
    %639 = vmatpush1.xpose.msra.mxu0 0.0
    %640 = vmatprep.subr.mxu0 0.0
    %641 = vmatpush1.xpose.msra.mxu0 0.0
    %642 = vmatprep.subr.mxu0 0.0
    %643 = vmatpush1.xpose.msra.mxu0 0.0
    %644 = vmatprep.subr.mxu0 0.0
    %645 = vmatpush1.xpose.msra.mxu0 0.0
    %646 = vmatprep.subr.mxu0 0.0
    %647 = vmatpush1.xpose.msra.mxu0 0.0
    %648 = vmatprep.subr.mxu0 0.0
    %649 = vmatpush1.xpose.msra.mxu0 0.0
    %650 = vmatprep.subr.mxu0 0.0
    %651 = vmatpush1.xpose.msra.mxu0 0.0
    %652 = vmatprep.subr.mxu0 0.0
    %653 = vmatpush1.xpose.msra.mxu0 0.0
    %654 = vmatprep.subr.mxu0 0.0
    %655 = vmatpush1.xpose.msra.mxu0 0.0
    %656 = vmatprep.mubr.f32.mxu0 1.0
    %657 = vmatmul.mubr.f32.gmra.mrb[0].mxu0 1.0
    %v658 = vpop.f32.mrb[0].mxu0
    %v659 = vadd.f32 0.0, %v658
    %v660 = vpop.f32.mrb[0].mxu0
    %661 = vdwg.mxu0
    %v662 = vrcp.pop %v659
    %v663 = vlaneseq
    %v664 = vshrl.u32 %v663, 7
    %v665 = vsub.s32 0, %v664
    %v666 = vrot.slane %v662, %v665
    %v667 = vmul.f32 %v589, %v666
    %v668 = vld [vmem:[%s3] sm:$0xff]
    %v670 = vsel %vm44, %v668, 0
    %672 = vmatprep.subr.mxu0 0.0
    %673 = vmatpush1.msra.mxu0 %v667
    %674 = vmatprep.subr.mxu0 0.0
    %675 = vmatpush1.msra.mxu0 0.0
    %676 = vmatprep.subr.mxu0 0.0
    %677 = vmatpush1.msra.mxu0 0.0
    %678 = vmatprep.subr.mxu0 0.0
    %679 = vmatpush1.msra.mxu0 0.0
    %680 = vmatprep.subr.mxu0 0.0
    %681 = vmatpush1.msra.mxu0 0.0
    %682 = vmatprep.subr.mxu0 0.0
    %683 = vmatpush1.msra.mxu0 0.0
    %684 = vmatprep.subr.mxu0 0.0
    %685 = vmatpush1.msra.mxu0 0.0
    %686 = vmatprep.subr.mxu0 0.0
    %687 = vmatpush1.msra.mxu0 0.0
    %688 = vmatprep.subr.mxu0 0.0
    %689 = vmatpush1.msra.mxu0 0.0
    %690 = vmatprep.subr.mxu0 0.0
    %691 = vmatpush1.msra.mxu0 0.0
    %692 = vmatprep.subr.mxu0 0.0
    %693 = vmatpush1.msra.mxu0 0.0
    %694 = vmatprep.subr.mxu0 0.0
    %695 = vmatpush1.msra.mxu0 0.0
    %696 = vmatprep.subr.mxu0 0.0
    %697 = vmatpush1.msra.mxu0 0.0
    %698 = vmatprep.subr.mxu0 0.0
    %699 = vmatpush1.msra.mxu0 0.0
    %700 = vmatprep.subr.mxu0 0.0
    %701 = vmatpush1.msra.mxu0 0.0
    %702 = vmatprep.subr.mxu0 0.0
    %703 = vmatpush1.msra.mxu0 0.0
    %704 = vmatprep.subr.mxu0 0.0
    %705 = vmatpush1.msra.mxu0 0.0
    %706 = vmatprep.subr.mxu0 0.0
    %707 = vmatpush1.msra.mxu0 0.0
    %708 = vmatprep.subr.mxu0 0.0
    %709 = vmatpush1.msra.mxu0 0.0
    %710 = vmatprep.subr.mxu0 0.0
    %711 = vmatpush1.msra.mxu0 0.0
    %712 = vmatprep.subr.mxu0 0.0
    %713 = vmatpush1.msra.mxu0 0.0
    %714 = vmatprep.subr.mxu0 0.0
    %715 = vmatpush1.msra.mxu0 0.0
    %716 = vmatprep.subr.mxu0 0.0
    %717 = vmatpush1.msra.mxu0 0.0
    %718 = vmatprep.subr.mxu0 0.0
    %719 = vmatpush1.msra.mxu0 0.0
    %720 = vmatprep.subr.mxu0 0.0
    %721 = vmatpush1.msra.mxu0 0.0
    %722 = vmatprep.subr.mxu0 0.0
    %723 = vmatpush1.msra.mxu0 0.0
    %724 = vmatprep.subr.mxu0 0.0
    %725 = vmatpush1.msra.mxu0 0.0
    %726 = vmatprep.subr.mxu0 0.0
    %727 = vmatpush1.msra.mxu0 0.0
    %728 = vmatprep.subr.mxu0 0.0
    %729 = vmatpush1.msra.mxu0 0.0
    %730 = vmatprep.subr.mxu0 0.0
    %731 = vmatpush1.msra.mxu0 0.0
    %732 = vmatprep.subr.mxu0 0.0
    %733 = vmatpush1.msra.mxu0 0.0
    %734 = vmatprep.subr.mxu0 0.0
    %735 = vmatpush1.msra.mxu0 0.0
    %736 = vmatprep.mubr.f32.mxu0 0.0
    %737 = vmatmul.mubr.f32.gmra.mrb[0].mxu0 %v670
    %v738 = vpop.f32.mrb[0].mxu0
    %v739 = vadd.f32 0.0, %v738
    %v740 = vpop.f32.mrb[0].mxu0
    %741 = vdwg.mxu0
    %v742 = vld [vmem:[%s4] sm:$0xff]
    %744 = vset.pattern.permute.xlu0 0
    %745 = vperm.xlu0 %744, %v742
    %v746 = vpop.permute.xlu0 %745
    %v748 = vadd.f32 %v21, %v746
    %v749 = vadd.f32 %v748, %v739
    %750 = vst [vmem:[#allocation2] sm:$0xff] %v749
    %751 = vxpose.xlu0.b32.start [1/16] %v123, 128
    %752 = vxpose.xlu0.b32.cont [2/16] 0.0, 128
    %753 = vxpose.xlu0.b32.cont [3/16] 0.0, 128
    %754 = vxpose.xlu0.b32.cont [4/16] 0.0, 128
    %755 = vxpose.xlu0.b32.cont [5/16] 0.0, 128
    %756 = vxpose.xlu0.b32.cont [6/16] 0.0, 128
    %757 = vxpose.xlu0.b32.cont [7/16] 0.0, 128
    %758 = vxpose.xlu0.b32.cont [8/16] 0.0, 128
    %759 = vxpose.xlu0.b32.cont [9/16] 0.0, 128
    %760 = vxpose.xlu0.b32.cont [10/16] 0.0, 128
    %761 = vxpose.xlu0.b32.cont [11/16] 0.0, 128
    %762 = vxpose.xlu0.b32.cont [12/16] 0.0, 128
    %763 = vxpose.xlu0.b32.cont [13/16] 0.0, 128
    %764 = vxpose.xlu0.b32.cont [14/16] 0.0, 128
    %765 = vxpose.xlu0.b32.cont [15/16] 0.0, 128
    %766 = vxpose.xlu0.b32.end [16/16] 0.0, 128
    %v767 = vpop.trf.xlu0
    %v768 = vpop.trf.xlu0
    %v769 = vpop.trf.xlu0
    %v770 = vpop.trf.xlu0
    %v771 = vpop.trf.xlu0
    %v772 = vpop.trf.xlu0
    %v773 = vpop.trf.xlu0
    %v774 = vpop.trf.xlu0
    %v775 = vpop.trf.xlu0
    %v776 = vpop.trf.xlu0
    %v777 = vpop.trf.xlu0
    %v778 = vpop.trf.xlu0
    %v779 = vpop.trf.xlu0
    %v780 = vpop.trf.xlu0
    %v781 = vpop.trf.xlu0
    %v782 = vpop.trf.xlu0
    %v784 = vsel %vm44, %v767, 0
    %v787 = vsel %vm44, %v768, 0
    %v790 = vsel %vm44, %v769, 0
    %v793 = vsel %vm44, %v770, 0
    %v796 = vsel %vm44, %v771, 0
    %v799 = vsel %vm44, %v772, 0
    %v802 = vsel %vm44, %v773, 0
    %v805 = vsel %vm44, %v774, 0
    %v808 = vsel %vm44, %v775, 0
    %v811 = vsel %vm44, %v776, 0
    %v814 = vsel %vm44, %v777, 0
    %v817 = vsel %vm44, %v778, 0
    %v820 = vsel %vm44, %v779, 0
    %v823 = vsel %vm44, %v780, 0
    %v826 = vsel %vm44, %v781, 0
    %v829 = vsel %vm44, %v782, 0
    %831 = vmatprep.subr.mxu0 %v129
    %832 = vmatpush1.msra.mxu0 %v127
    %833 = vmatprep.subr.mxu0 0.0
    %834 = vmatpush1.msra.mxu0 0.0
    %835 = vmatprep.subr.mxu0 0.0
    %836 = vmatpush1.msra.mxu0 0.0
    %837 = vmatprep.subr.mxu0 0.0
    %838 = vmatpush1.msra.mxu0 0.0
    %839 = vmatprep.subr.mxu0 0.0
    %840 = vmatpush1.msra.mxu0 0.0
    %841 = vmatprep.subr.mxu0 0.0
    %842 = vmatpush1.msra.mxu0 0.0
    %843 = vmatprep.subr.mxu0 0.0
    %844 = vmatpush1.msra.mxu0 0.0
    %845 = vmatprep.subr.mxu0 0.0
    %846 = vmatpush1.msra.mxu0 0.0
    %847 = vmatprep.subr.mxu0 0.0
    %848 = vmatpush1.msra.mxu0 0.0
    %849 = vmatprep.subr.mxu0 0.0
    %850 = vmatpush1.msra.mxu0 0.0
    %851 = vmatprep.subr.mxu0 0.0
    %852 = vmatpush1.msra.mxu0 0.0
    %853 = vmatprep.subr.mxu0 0.0
    %854 = vmatpush1.msra.mxu0 0.0
    %855 = vmatprep.subr.mxu0 0.0
    %856 = vmatpush1.msra.mxu0 0.0
    %857 = vmatprep.subr.mxu0 0.0
    %858 = vmatpush1.msra.mxu0 0.0
    %859 = vmatprep.subr.mxu0 0.0
    %860 = vmatpush1.msra.mxu0 0.0
    %861 = vmatprep.subr.mxu0 0.0
    %862 = vmatpush1.msra.mxu0 0.0
    %863 = vmatprep.subr.mxu0 0.0
    %864 = vmatpush1.msra.mxu0 0.0
    %865 = vmatprep.subr.mxu0 0.0
    %866 = vmatpush1.msra.mxu0 0.0
    %867 = vmatprep.subr.mxu0 0.0
    %868 = vmatpush1.msra.mxu0 0.0
    %869 = vmatprep.subr.mxu0 0.0
    %870 = vmatpush1.msra.mxu0 0.0
    %871 = vmatprep.subr.mxu0 0.0
    %872 = vmatpush1.msra.mxu0 0.0
    %873 = vmatprep.subr.mxu0 0.0
    %874 = vmatpush1.msra.mxu0 0.0
    %875 = vmatprep.subr.mxu0 0.0
    %876 = vmatpush1.msra.mxu0 0.0
    %877 = vmatprep.subr.mxu0 0.0
    %878 = vmatpush1.msra.mxu0 0.0
    %879 = vmatprep.subr.mxu0 0.0
    %880 = vmatpush1.msra.mxu0 0.0
    %881 = vmatprep.subr.mxu0 0.0
    %882 = vmatpush1.msra.mxu0 0.0
    %883 = vmatprep.subr.mxu0 0.0
    %884 = vmatpush1.msra.mxu0 0.0
    %885 = vmatprep.subr.mxu0 0.0
    %886 = vmatpush1.msra.mxu0 0.0
    %887 = vmatprep.subr.mxu0 0.0
    %888 = vmatpush1.msra.mxu0 0.0
    %889 = vmatprep.subr.mxu0 0.0
    %890 = vmatpush1.msra.mxu0 0.0
    %891 = vmatprep.subr.mxu0 0.0
    %892 = vmatpush1.msra.mxu0 0.0
    %893 = vmatprep.subr.mxu0 0.0
    %894 = vmatpush1.msra.mxu0 0.0
    %895 = vmatprep.mubr.f32.mxu0 0.0
    %896 = vmatmul.mubr.f32.gmra.mrb[0].mxu0 %v784
    %v897 = vpop.f32.mrb[0].mxu0
    %v898 = vadd.f32 0.0, %v897
    %v899 = vpop.f32.mrb[0].mxu0
    %v900 = vadd.f32 0.0, %v899
    %901 = vmatprep.mubr.f32.mxu0 0.0
    %902 = vmatmul.mubr.f32.gmra.mrb[0].mxu0 %v787
    %v903 = vpop.f32.mrb[0].mxu0
    %v904 = vadd.f32 0.0, %v903
    %v905 = vpop.f32.mrb[0].mxu0
    %v906 = vadd.f32 0.0, %v905
    %907 = vmatprep.mubr.f32.mxu0 0.0
    %908 = vmatmul.mubr.f32.gmra.mrb[0].mxu0 %v790
    %v909 = vpop.f32.mrb[0].mxu0
    %v910 = vadd.f32 0.0, %v909
    %v911 = vpop.f32.mrb[0].mxu0
    %v912 = vadd.f32 0.0, %v911
    %913 = vmatprep.mubr.f32.mxu0 0.0
    %914 = vmatmul.mubr.f32.gmra.mrb[0].mxu0 %v793
    %v915 = vpop.f32.mrb[0].mxu0
    %v916 = vadd.f32 0.0, %v915
    %v917 = vpop.f32.mrb[0].mxu0
    %v918 = vadd.f32 0.0, %v917
    %919 = vmatprep.mubr.f32.mxu0 0.0
    %920 = vmatmul.mubr.f32.gmra.mrb[0].mxu0 %v796
    %v921 = vpop.f32.mrb[0].mxu0
    %v922 = vadd.f32 0.0, %v921
    %v923 = vpop.f32.mrb[0].mxu0
    %v924 = vadd.f32 0.0, %v923
    %925 = vmatprep.mubr.f32.mxu0 0.0
    %926 = vmatmul.mubr.f32.gmra.mrb[0].mxu0 %v799
    %v927 = vpop.f32.mrb[0].mxu0
    %v928 = vadd.f32 0.0, %v927
    %v929 = vpop.f32.mrb[0].mxu0
    %v930 = vadd.f32 0.0, %v929
    %931 = vmatprep.mubr.f32.mxu0 0.0
    %932 = vmatmul.mubr.f32.gmra.mrb[0].mxu0 %v802
    %v933 = vpop.f32.mrb[0].mxu0
    %v934 = vadd.f32 0.0, %v933
    %v935 = vpop.f32.mrb[0].mxu0
    %v936 = vadd.f32 0.0, %v935
    %937 = vmatprep.mubr.f32.mxu0 0.0
    %938 = vmatmul.mubr.f32.gmra.mrb[0].mxu0 %v805
    %v939 = vpop.f32.mrb[0].mxu0
    %v940 = vadd.f32 0.0, %v939
    %v941 = vpop.f32.mrb[0].mxu0
    %v942 = vadd.f32 0.0, %v941
    %943 = vmatprep.mubr.f32.mxu0 0.0
    %944 = vmatmul.mubr.f32.gmra.mrb[0].mxu0 %v808
    %v945 = vpop.f32.mrb[0].mxu0
    %v946 = vadd.f32 0.0, %v945
    %v947 = vpop.f32.mrb[0].mxu0
    %v948 = vadd.f32 0.0, %v947
    %949 = vmatprep.mubr.f32.mxu0 0.0
    %950 = vmatmul.mubr.f32.gmra.mrb[0].mxu0 %v811
    %v951 = vpop.f32.mrb[0].mxu0
    %v952 = vadd.f32 0.0, %v951
    %v953 = vpop.f32.mrb[0].mxu0
    %v954 = vadd.f32 0.0, %v953
    %955 = vmatprep.mubr.f32.mxu0 0.0
    %956 = vmatmul.mubr.f32.gmra.mrb[0].mxu0 %v814
    %v957 = vpop.f32.mrb[0].mxu0
    %v958 = vadd.f32 0.0, %v957
    %v959 = vpop.f32.mrb[0].mxu0
    %v960 = vadd.f32 0.0, %v959
    %961 = vmatprep.mubr.f32.mxu0 0.0
    %962 = vmatmul.mubr.f32.gmra.mrb[0].mxu0 %v817
    %v963 = vpop.f32.mrb[0].mxu0
    %v964 = vadd.f32 0.0, %v963
    %v965 = vpop.f32.mrb[0].mxu0
    %v966 = vadd.f32 0.0, %v965
    %967 = vmatprep.mubr.f32.mxu0 0.0
    %968 = vmatmul.mubr.f32.gmra.mrb[0].mxu0 %v820
    %v969 = vpop.f32.mrb[0].mxu0
    %v970 = vadd.f32 0.0, %v969
    %v971 = vpop.f32.mrb[0].mxu0
    %v972 = vadd.f32 0.0, %v971
    %973 = vmatprep.mubr.f32.mxu0 0.0
    %974 = vmatmul.mubr.f32.gmra.mrb[0].mxu0 %v823
    %v975 = vpop.f32.mrb[0].mxu0
    %v976 = vadd.f32 0.0, %v975
    %v977 = vpop.f32.mrb[0].mxu0
    %v978 = vadd.f32 0.0, %v977
    %979 = vmatprep.mubr.f32.mxu0 0.0
    %980 = vmatmul.mubr.f32.gmra.mrb[0].mxu0 %v826
    %v981 = vpop.f32.mrb[0].mxu0
    %v982 = vadd.f32 0.0, %v981
    %v983 = vpop.f32.mrb[0].mxu0
    %v984 = vadd.f32 0.0, %v983
    %985 = vmatprep.mubr.f32.mxu0 0.0
    %986 = vmatmul.mubr.f32.gmra.mrb[0].mxu0 %v829
    %v987 = vpop.f32.mrb[0].mxu0
    %v988 = vadd.f32 0.0, %v987
    %v989 = vpop.f32.mrb[0].mxu0
    %v990 = vadd.f32 0.0, %v989
    %991 = vdwg.mxu0
    %v992 = vmax.f32 %v898, %v900
    %993 = vmax.xlane.f32.xlu0 %v992
    %v994 = vpop.xlane.xlu0 %993
    %v995 = vmax.f32 %v904, %v906
    %996 = vmax.xlane.f32.xlu0 %v995
    %v997 = vpop.xlane.xlu0 %996
    %v998 = vmax.f32 %v910, %v912
    %999 = vmax.xlane.f32.xlu0 %v998
    %v1000 = vpop.xlane.xlu0 %999
    %v1001 = vmax.f32 %v916, %v918
    %1002 = vmax.xlane.f32.xlu0 %v1001
    %v1003 = vpop.xlane.xlu0 %1002
    %v1004 = vmax.f32 %v922, %v924
    %1005 = vmax.xlane.f32.xlu0 %v1004
    %v1006 = vpop.xlane.xlu0 %1005
    %v1007 = vmax.f32 %v928, %v930
    %1008 = vmax.xlane.f32.xlu0 %v1007
    %v1009 = vpop.xlane.xlu0 %1008
    %v1010 = vmax.f32 %v934, %v936
    %1011 = vmax.xlane.f32.xlu0 %v1010
    %v1012 = vpop.xlane.xlu0 %1011
    %v1013 = vmax.f32 %v940, %v942
    %1014 = vmax.xlane.f32.xlu0 %v1013
    %v1015 = vpop.xlane.xlu0 %1014
    %v1016 = vmax.f32 %v946, %v948
    %1017 = vmax.xlane.f32.xlu0 %v1016
    %v1018 = vpop.xlane.xlu0 %1017
    %v1019 = vmax.f32 %v952, %v954
    %1020 = vmax.xlane.f32.xlu0 %v1019
    %v1021 = vpop.xlane.xlu0 %1020
    %v1022 = vmax.f32 %v958, %v960
    %1023 = vmax.xlane.f32.xlu0 %v1022
    %v1024 = vpop.xlane.xlu0 %1023
    %v1025 = vmax.f32 %v964, %v966
    %1026 = vmax.xlane.f32.xlu0 %v1025
    %v1027 = vpop.xlane.xlu0 %1026
    %v1028 = vmax.f32 %v970, %v972
    %1029 = vmax.xlane.f32.xlu0 %v1028
    %v1030 = vpop.xlane.xlu0 %1029
    %v1031 = vmax.f32 %v976, %v978
    %1032 = vmax.xlane.f32.xlu0 %v1031
    %v1033 = vpop.xlane.xlu0 %1032
    %v1034 = vmax.f32 %v982, %v984
    %1035 = vmax.xlane.f32.xlu0 %v1034
    %v1036 = vpop.xlane.xlu0 %1035
    %v1037 = vmax.f32 %v988, %v990
    %1038 = vmax.xlane.f32.xlu0 %v1037
    %v1039 = vpop.xlane.xlu0 %1038
    %v1040 = vsub.f32 %v898, %v994
    %v1041 = vsub.f32 %v900, %v994
    %v1042 = vsub.f32 %v904, %v997
    %v1043 = vsub.f32 %v906, %v997
    %v1044 = vsub.f32 %v910, %v1000
    %v1045 = vsub.f32 %v912, %v1000
    %v1046 = vsub.f32 %v916, %v1003
    %v1047 = vsub.f32 %v918, %v1003
    %v1048 = vsub.f32 %v922, %v1006
    %v1049 = vsub.f32 %v924, %v1006
    %v1050 = vsub.f32 %v928, %v1009
    %v1051 = vsub.f32 %v930, %v1009
    %v1052 = vsub.f32 %v934, %v1012
    %v1053 = vsub.f32 %v936, %v1012
    %v1054 = vsub.f32 %v940, %v1015
    %v1055 = vsub.f32 %v942, %v1015
    %v1056 = vsub.f32 %v946, %v1018
    %v1057 = vsub.f32 %v948, %v1018
    %v1058 = vsub.f32 %v952, %v1021
    %v1059 = vsub.f32 %v954, %v1021
    %v1060 = vsub.f32 %v958, %v1024
    %v1061 = vsub.f32 %v960, %v1024
    %v1062 = vsub.f32 %v964, %v1027
    %v1063 = vsub.f32 %v966, %v1027
    %v1064 = vsub.f32 %v970, %v1030
    %v1065 = vsub.f32 %v972, %v1030
    %v1066 = vsub.f32 %v976, %v1033
    %v1067 = vsub.f32 %v978, %v1033
    %v1068 = vsub.f32 %v982, %v1036
    %v1069 = vsub.f32 %v984, %v1036
    %v1070 = vsub.f32 %v988, %v1039
    %v1071 = vsub.f32 %v990, %v1039
    %v1072 = vmul.f32 %v1040, 1.442695
    %v1073 = vpow.pop %v1072
    %v1074 = vmul.f32 %v1041, 1.442695
    %v1075 = vpow.pop %v1074
    %v1076 = vmul.f32 %v1042, 1.442695
    %v1077 = vpow.pop %v1076
    %v1078 = vmul.f32 %v1043, 1.442695
    %v1079 = vpow.pop %v1078
    %v1080 = vmul.f32 %v1044, 1.442695
    %v1081 = vpow.pop %v1080
    %v1082 = vmul.f32 %v1045, 1.442695
    %v1083 = vpow.pop %v1082
    %v1084 = vmul.f32 %v1046, 1.442695
    %v1085 = vpow.pop %v1084
    %v1086 = vmul.f32 %v1047, 1.442695
    %v1087 = vpow.pop %v1086
    %v1088 = vmul.f32 %v1048, 1.442695
    %v1089 = vpow.pop %v1088
    %v1090 = vmul.f32 %v1049, 1.442695
    %v1091 = vpow.pop %v1090
    %v1092 = vmul.f32 %v1050, 1.442695
    %v1093 = vpow.pop %v1092
    %v1094 = vmul.f32 %v1051, 1.442695
    %v1095 = vpow.pop %v1094
    %v1096 = vmul.f32 %v1052, 1.442695
    %v1097 = vpow.pop %v1096
    %v1098 = vmul.f32 %v1053, 1.442695
    %v1099 = vpow.pop %v1098
    %v1100 = vmul.f32 %v1054, 1.442695
    %v1101 = vpow.pop %v1100
    %v1102 = vmul.f32 %v1055, 1.442695
    %v1103 = vpow.pop %v1102
    %v1104 = vmul.f32 %v1056, 1.442695
    %v1105 = vpow.pop %v1104
    %v1106 = vmul.f32 %v1057, 1.442695
    %v1107 = vpow.pop %v1106
    %v1108 = vmul.f32 %v1058, 1.442695
    %v1109 = vpow.pop %v1108
    %v1110 = vmul.f32 %v1059, 1.442695
    %v1111 = vpow.pop %v1110
    %v1112 = vmul.f32 %v1060, 1.442695
    %v1113 = vpow.pop %v1112
    %v1114 = vmul.f32 %v1061, 1.442695
    %v1115 = vpow.pop %v1114
    %v1116 = vmul.f32 %v1062, 1.442695
    %v1117 = vpow.pop %v1116
    %v1118 = vmul.f32 %v1063, 1.442695
    %v1119 = vpow.pop %v1118
    %v1120 = vmul.f32 %v1064, 1.442695
    %v1121 = vpow.pop %v1120
    %v1122 = vmul.f32 %v1065, 1.442695
    %v1123 = vpow.pop %v1122
    %v1124 = vmul.f32 %v1066, 1.442695
    %v1125 = vpow.pop %v1124
    %v1126 = vmul.f32 %v1067, 1.442695
    %v1127 = vpow.pop %v1126
    %v1128 = vmul.f32 %v1068, 1.442695
    %v1129 = vpow.pop %v1128
    %v1130 = vmul.f32 %v1069, 1.442695
    %v1131 = vpow.pop %v1130
    %v1132 = vmul.f32 %v1070, 1.442695
    %v1133 = vpow.pop %v1132
    %v1134 = vmul.f32 %v1071, 1.442695
    %v1135 = vpow.pop %v1134
    %1136 = vmatprep.subr.mxu0 %v1075
    %1137 = vmatpush1.xpose.msra.mxu0 %v1073
    %1138 = vmatprep.subr.mxu0 %v1079
    %1139 = vmatpush1.xpose.msra.mxu0 %v1077
    %1140 = vmatprep.subr.mxu0 %v1083
    %1141 = vmatpush1.xpose.msra.mxu0 %v1081
    %1142 = vmatprep.subr.mxu0 %v1087
    %1143 = vmatpush1.xpose.msra.mxu0 %v1085
    %1144 = vmatprep.subr.mxu0 %v1091
    %1145 = vmatpush1.xpose.msra.mxu0 %v1089
    %1146 = vmatprep.subr.mxu0 %v1095
    %1147 = vmatpush1.xpose.msra.mxu0 %v1093
    %1148 = vmatprep.subr.mxu0 %v1099
    %1149 = vmatpush1.xpose.msra.mxu0 %v1097
    %1150 = vmatprep.subr.mxu0 %v1103
    %1151 = vmatpush1.xpose.msra.mxu0 %v1101
    %1152 = vmatprep.subr.mxu0 %v1107
    %1153 = vmatpush1.xpose.msra.mxu0 %v1105
    %1154 = vmatprep.subr.mxu0 %v1111
    %1155 = vmatpush1.xpose.msra.mxu0 %v1109
    %1156 = vmatprep.subr.mxu0 %v1115
    %1157 = vmatpush1.xpose.msra.mxu0 %v1113
    %1158 = vmatprep.subr.mxu0 %v1119
    %1159 = vmatpush1.xpose.msra.mxu0 %v1117
    %1160 = vmatprep.subr.mxu0 %v1123
    %1161 = vmatpush1.xpose.msra.mxu0 %v1121
    %1162 = vmatprep.subr.mxu0 %v1127
    %1163 = vmatpush1.xpose.msra.mxu0 %v1125
    %1164 = vmatprep.subr.mxu0 %v1131
    %1165 = vmatpush1.xpose.msra.mxu0 %v1129
    %1166 = vmatprep.subr.mxu0 %v1135
    %1167 = vmatpush1.xpose.msra.mxu0 %v1133
    %1168 = vmatprep.subr.mxu0 0.0
    %1169 = vmatpush1.xpose.msra.mxu0 0.0
    %1170 = vmatprep.subr.mxu0 0.0
    %1171 = vmatpush1.xpose.msra.mxu0 0.0
    %1172 = vmatprep.subr.mxu0 0.0
    %1173 = vmatpush1.xpose.msra.mxu0 0.0
    %1174 = vmatprep.subr.mxu0 0.0
    %1175 = vmatpush1.xpose.msra.mxu0 0.0
    %1176 = vmatprep.subr.mxu0 0.0
    %1177 = vmatpush1.xpose.msra.mxu0 0.0
    %1178 = vmatprep.subr.mxu0 0.0
    %1179 = vmatpush1.xpose.msra.mxu0 0.0
    %1180 = vmatprep.subr.mxu0 0.0
    %1181 = vmatpush1.xpose.msra.mxu0 0.0
    %1182 = vmatprep.subr.mxu0 0.0
    %1183 = vmatpush1.xpose.msra.mxu0 0.0
    %1184 = vmatprep.subr.mxu0 0.0
    %1185 = vmatpush1.xpose.msra.mxu0 0.0
    %1186 = vmatprep.subr.mxu0 0.0
    %1187 = vmatpush1.xpose.msra.mxu0 0.0
    %1188 = vmatprep.subr.mxu0 0.0
    %1189 = vmatpush1.xpose.msra.mxu0 0.0
    %1190 = vmatprep.subr.mxu0 0.0
    %1191 = vmatpush1.xpose.msra.mxu0 0.0
    %1192 = vmatprep.subr.mxu0 0.0
    %1193 = vmatpush1.xpose.msra.mxu0 0.0
    %1194 = vmatprep.subr.mxu0 0.0
    %1195 = vmatpush1.xpose.msra.mxu0 0.0
    %1196 = vmatprep.subr.mxu0 0.0
    %1197 = vmatpush1.xpose.msra.mxu0 0.0
    %1198 = vmatprep.subr.mxu0 0.0
    %1199 = vmatpush1.xpose.msra.mxu0 0.0
    %1200 = vmatprep.mubr.f32.mxu0 %v135
    %1201 = vmatmul.mubr.f32.gmra.mrb[0].mxu0 %v133
    %v1202 = vpop.f32.mrb[0].mxu0
    %v1203 = vadd.f32 0.0, %v1202
    %v1204 = vpop.f32.mrb[0].mxu0
    %1205 = vdwg.mxu0
    %1206 = vmatprep.subr.mxu0 %v1075
    %1207 = vmatpush1.xpose.msra.mxu0 %v1073
    %1208 = vmatprep.subr.mxu0 %v1079
    %1209 = vmatpush1.xpose.msra.mxu0 %v1077
    %1210 = vmatprep.subr.mxu0 %v1083
    %1211 = vmatpush1.xpose.msra.mxu0 %v1081
    %1212 = vmatprep.subr.mxu0 %v1087
    %1213 = vmatpush1.xpose.msra.mxu0 %v1085
    %1214 = vmatprep.subr.mxu0 %v1091
    %1215 = vmatpush1.xpose.msra.mxu0 %v1089
    %1216 = vmatprep.subr.mxu0 %v1095
    %1217 = vmatpush1.xpose.msra.mxu0 %v1093
    %1218 = vmatprep.subr.mxu0 %v1099
    %1219 = vmatpush1.xpose.msra.mxu0 %v1097
    %1220 = vmatprep.subr.mxu0 %v1103
    %1221 = vmatpush1.xpose.msra.mxu0 %v1101
    %1222 = vmatprep.subr.mxu0 %v1107
    %1223 = vmatpush1.xpose.msra.mxu0 %v1105
    %1224 = vmatprep.subr.mxu0 %v1111
    %1225 = vmatpush1.xpose.msra.mxu0 %v1109
    %1226 = vmatprep.subr.mxu0 %v1115
    %1227 = vmatpush1.xpose.msra.mxu0 %v1113
    %1228 = vmatprep.subr.mxu0 %v1119
    %1229 = vmatpush1.xpose.msra.mxu0 %v1117
    %1230 = vmatprep.subr.mxu0 %v1123
    %1231 = vmatpush1.xpose.msra.mxu0 %v1121
    %1232 = vmatprep.subr.mxu0 %v1127
    %1233 = vmatpush1.xpose.msra.mxu0 %v1125
    %1234 = vmatprep.subr.mxu0 %v1131
    %1235 = vmatpush1.xpose.msra.mxu0 %v1129
    %1236 = vmatprep.subr.mxu0 %v1135
    %1237 = vmatpush1.xpose.msra.mxu0 %v1133
    %1238 = vmatprep.subr.mxu0 0.0
    %1239 = vmatpush1.xpose.msra.mxu0 0.0
    %1240 = vmatprep.subr.mxu0 0.0
    %1241 = vmatpush1.xpose.msra.mxu0 0.0
    %1242 = vmatprep.subr.mxu0 0.0
    %1243 = vmatpush1.xpose.msra.mxu0 0.0
    %1244 = vmatprep.subr.mxu0 0.0
    %1245 = vmatpush1.xpose.msra.mxu0 0.0
    %1246 = vmatprep.subr.mxu0 0.0
    %1247 = vmatpush1.xpose.msra.mxu0 0.0
    %1248 = vmatprep.subr.mxu0 0.0
    %1249 = vmatpush1.xpose.msra.mxu0 0.0
    %1250 = vmatprep.subr.mxu0 0.0
    %1251 = vmatpush1.xpose.msra.mxu0 0.0
    %1252 = vmatprep.subr.mxu0 0.0
    %1253 = vmatpush1.xpose.msra.mxu0 0.0
    %1254 = vmatprep.subr.mxu0 0.0
    %1255 = vmatpush1.xpose.msra.mxu0 0.0
    %1256 = vmatprep.subr.mxu0 0.0
    %1257 = vmatpush1.xpose.msra.mxu0 0.0
    %1258 = vmatprep.subr.mxu0 0.0
    %1259 = vmatpush1.xpose.msra.mxu0 0.0
    %1260 = vmatprep.subr.mxu0 0.0
    %1261 = vmatpush1.xpose.msra.mxu0 0.0
    %1262 = vmatprep.subr.mxu0 0.0
    %1263 = vmatpush1.xpose.msra.mxu0 0.0
    %1264 = vmatprep.subr.mxu0 0.0
    %1265 = vmatpush1.xpose.msra.mxu0 0.0
    %1266 = vmatprep.subr.mxu0 0.0
    %1267 = vmatpush1.xpose.msra.mxu0 0.0
    %1268 = vmatprep.subr.mxu0 0.0
    %1269 = vmatpush1.xpose.msra.mxu0 0.0
    %1270 = vmatprep.mubr.f32.mxu0 1.0
    %1271 = vmatmul.mubr.f32.gmra.mrb[0].mxu0 1.0
    %v1272 = vpop.f32.mrb[0].mxu0
    %v1273 = vadd.f32 0.0, %v1272
    %v1274 = vpop.f32.mrb[0].mxu0
    %1275 = vdwg.mxu0
    %v1276 = vrcp.pop %v1273
    %v1277 = vlaneseq
    %v1278 = vshrl.u32 %v1277, 7
    %v1279 = vsub.s32 0, %v1278
    %v1280 = vrot.slane %v1276, %v1279
    %v1281 = vmul.f32 %v1203, %v1280
    %v1282 = vld [vmem:[%s3] sm:$0xff]
    %v1284 = vsel %vm44, %v1282, 0
    %1286 = vmatprep.subr.mxu0 0.0
    %1287 = vmatpush1.msra.mxu0 %v1281
    %1288 = vmatprep.subr.mxu0 0.0
    %1289 = vmatpush1.msra.mxu0 0.0
    %1290 = vmatprep.subr.mxu0 0.0
    %1291 = vmatpush1.msra.mxu0 0.0
    %1292 = vmatprep.subr.mxu0 0.0
    %1293 = vmatpush1.msra.mxu0 0.0
    %1294 = vmatprep.subr.mxu0 0.0
    %1295 = vmatpush1.msra.mxu0 0.0
    %1296 = vmatprep.subr.mxu0 0.0
    %1297 = vmatpush1.msra.mxu0 0.0
    %1298 = vmatprep.subr.mxu0 0.0
    %1299 = vmatpush1.msra.mxu0 0.0
    %1300 = vmatprep.subr.mxu0 0.0
    %1301 = vmatpush1.msra.mxu0 0.0
    %1302 = vmatprep.subr.mxu0 0.0
    %1303 = vmatpush1.msra.mxu0 0.0
    %1304 = vmatprep.subr.mxu0 0.0
    %1305 = vmatpush1.msra.mxu0 0.0
    %1306 = vmatprep.subr.mxu0 0.0
    %1307 = vmatpush1.msra.mxu0 0.0
    %1308 = vmatprep.subr.mxu0 0.0
    %1309 = vmatpush1.msra.mxu0 0.0
    %1310 = vmatprep.subr.mxu0 0.0
    %1311 = vmatpush1.msra.mxu0 0.0
    %1312 = vmatprep.subr.mxu0 0.0
    %1313 = vmatpush1.msra.mxu0 0.0
    %1314 = vmatprep.subr.mxu0 0.0
    %1315 = vmatpush1.msra.mxu0 0.0
    %1316 = vmatprep.subr.mxu0 0.0
    %1317 = vmatpush1.msra.mxu0 0.0
    %1318 = vmatprep.subr.mxu0 0.0
    %1319 = vmatpush1.msra.mxu0 0.0
    %1320 = vmatprep.subr.mxu0 0.0
    %1321 = vmatpush1.msra.mxu0 0.0
    %1322 = vmatprep.subr.mxu0 0.0
    %1323 = vmatpush1.msra.mxu0 0.0
    %1324 = vmatprep.subr.mxu0 0.0
    %1325 = vmatpush1.msra.mxu0 0.0
    %1326 = vmatprep.subr.mxu0 0.0
    %1327 = vmatpush1.msra.mxu0 0.0
    %1328 = vmatprep.subr.mxu0 0.0
    %1329 = vmatpush1.msra.mxu0 0.0
    %1330 = vmatprep.subr.mxu0 0.0
    %1331 = vmatpush1.msra.mxu0 0.0
    %1332 = vmatprep.subr.mxu0 0.0
    %1333 = vmatpush1.msra.mxu0 0.0
    %1334 = vmatprep.subr.mxu0 0.0
    %1335 = vmatpush1.msra.mxu0 0.0
    %1336 = vmatprep.subr.mxu0 0.0
    %1337 = vmatpush1.msra.mxu0 0.0
    %1338 = vmatprep.subr.mxu0 0.0
    %1339 = vmatpush1.msra.mxu0 0.0
    %1340 = vmatprep.subr.mxu0 0.0
    %1341 = vmatpush1.msra.mxu0 0.0
    %1342 = vmatprep.subr.mxu0 0.0
    %1343 = vmatpush1.msra.mxu0 0.0
    %1344 = vmatprep.subr.mxu0 0.0
    %1345 = vmatpush1.msra.mxu0 0.0
    %1346 = vmatprep.subr.mxu0 0.0
    %1347 = vmatpush1.msra.mxu0 0.0
    %1348 = vmatprep.subr.mxu0 0.0
    %1349 = vmatpush1.msra.mxu0 0.0
    %1350 = vmatprep.mubr.f32.mxu0 0.0
    %1351 = vmatmul.mubr.f32.gmra.mrb[0].mxu0 %v1284
    %v1352 = vpop.f32.mrb[0].mxu0
    %v1353 = vadd.f32 0.0, %v1352
    %v1354 = vpop.f32.mrb[0].mxu0
    %1355 = vdwg.mxu0
    %v1356 = vld [vmem:[%s4] sm:$0xff]
    %1358 = vset.pattern.permute.xlu0 0
    %1359 = vperm.xlu0 %1358, %v1356
    %v1360 = vpop.permute.xlu0 %1359
    %v1362 = vadd.f32 %v22, %v1360
    %v1363 = vadd.f32 %v1362, %v1353
    %1364 = vst [vmem:[#allocation2 + $0x8] sm:$0xff] %v1363
    %s1365 = scalar_lea.vmem %s0, 16
    %v1366 = vld [vmem:[%s1365] sm:$0xff]
    %v1367 = vld [vmem:[%s1365 + $0x8] sm:$0xff]
    %v1368 = vld [vmem:[%s1] sm:$0xff]
    %v1369 = vld [vmem:[%s1 + $0x8] sm:$0xff]
    %v1370 = vld [vmem:[%s1 + $0x10] sm:$0xff]
    %v1371 = vld [vmem:[%s2] sm:$0xff]
    %v1372 = vld [vmem:[%s2 + $0x8] sm:$0xff]
    %v1373 = vld [vmem:[%s2 + $0x10] sm:$0xff]
    %1375 = vset.pattern.permute.xlu0 0
    %1376 = vperm.xlu0 %1375, %v1371
    %v1377 = vpop.permute.xlu0 %1376
    %1380 = vset.pattern.permute.xlu0 0
    %1381 = vperm.xlu0 %1380, %v1372
    %v1382 = vpop.permute.xlu0 %1381
    %1385 = vset.pattern.permute.xlu0 0
    %1386 = vperm.xlu0 %1385, %v1373
    %v1387 = vpop.permute.xlu0 %1386
    %v1390 = vsel %vm44, %v1368, 0
    %v1393 = vsel %vm44, %v1369, 0
    %v1396 = vsel %vm44, %v1370, 0
    %1398 = vmatprep.subr.mxu0 %v1367
    %1399 = vmatpush1.msra.mxu0 %v1366
    %1400 = vmatprep.subr.mxu0 0.0
    %1401 = vmatpush1.msra.mxu0 0.0
    %1402 = vmatprep.subr.mxu0 0.0
    %1403 = vmatpush1.msra.mxu0 0.0
    %1404 = vmatprep.subr.mxu0 0.0
    %1405 = vmatpush1.msra.mxu0 0.0
    %1406 = vmatprep.subr.mxu0 0.0
    %1407 = vmatpush1.msra.mxu0 0.0
    %1408 = vmatprep.subr.mxu0 0.0
    %1409 = vmatpush1.msra.mxu0 0.0
    %1410 = vmatprep.subr.mxu0 0.0
    %1411 = vmatpush1.msra.mxu0 0.0
    %1412 = vmatprep.subr.mxu0 0.0
    %1413 = vmatpush1.msra.mxu0 0.0
    %1414 = vmatprep.subr.mxu0 0.0
    %1415 = vmatpush1.msra.mxu0 0.0
    %1416 = vmatprep.subr.mxu0 0.0
    %1417 = vmatpush1.msra.mxu0 0.0
    %1418 = vmatprep.subr.mxu0 0.0
    %1419 = vmatpush1.msra.mxu0 0.0
    %1420 = vmatprep.subr.mxu0 0.0
    %1421 = vmatpush1.msra.mxu0 0.0
    %1422 = vmatprep.subr.mxu0 0.0
    %1423 = vmatpush1.msra.mxu0 0.0
    %1424 = vmatprep.subr.mxu0 0.0
    %1425 = vmatpush1.msra.mxu0 0.0
    %1426 = vmatprep.subr.mxu0 0.0
    %1427 = vmatpush1.msra.mxu0 0.0
    %1428 = vmatprep.subr.mxu0 0.0
    %1429 = vmatpush1.msra.mxu0 0.0
    %1430 = vmatprep.subr.mxu0 0.0
    %1431 = vmatpush1.msra.mxu0 0.0
    %1432 = vmatprep.subr.mxu0 0.0
    %1433 = vmatpush1.msra.mxu0 0.0
    %1434 = vmatprep.subr.mxu0 0.0
    %1435 = vmatpush1.msra.mxu0 0.0
    %1436 = vmatprep.subr.mxu0 0.0
    %1437 = vmatpush1.msra.mxu0 0.0
    %1438 = vmatprep.subr.mxu0 0.0
    %1439 = vmatpush1.msra.mxu0 0.0
    %1440 = vmatprep.subr.mxu0 0.0
    %1441 = vmatpush1.msra.mxu0 0.0
    %1442 = vmatprep.subr.mxu0 0.0
    %1443 = vmatpush1.msra.mxu0 0.0
    %1444 = vmatprep.subr.mxu0 0.0
    %1445 = vmatpush1.msra.mxu0 0.0
    %1446 = vmatprep.subr.mxu0 0.0
    %1447 = vmatpush1.msra.mxu0 0.0
    %1448 = vmatprep.subr.mxu0 0.0
    %1449 = vmatpush1.msra.mxu0 0.0
    %1450 = vmatprep.subr.mxu0 0.0
    %1451 = vmatpush1.msra.mxu0 0.0
    %1452 = vmatprep.subr.mxu0 0.0
    %1453 = vmatpush1.msra.mxu0 0.0
    %1454 = vmatprep.subr.mxu0 0.0
    %1455 = vmatpush1.msra.mxu0 0.0
    %1456 = vmatprep.subr.mxu0 0.0
    %1457 = vmatpush1.msra.mxu0 0.0
    %1458 = vmatprep.subr.mxu0 0.0
    %1459 = vmatpush1.msra.mxu0 0.0
    %1460 = vmatprep.subr.mxu0 0.0
    %1461 = vmatpush1.msra.mxu0 0.0
    %1462 = vmatprep.mubr.f32.mxu0 0.0
    %1463 = vmatmul.mubr.f32.gmra.mrb[0].mxu0 %v1390
    %v1464 = vpop.f32.mrb[0].mxu0
    %v1465 = vadd.f32 %v1377, %v1464
    %v1466 = vpop.f32.mrb[0].mxu0
    %v1467 = vadd.f32 %v1377, %v1466
    %1468 = vmatprep.mubr.f32.mxu0 0.0
    %1469 = vmatmul.mubr.f32.gmra.mrb[0].mxu0 %v1393
    %v1470 = vpop.f32.mrb[0].mxu0
    %v1471 = vadd.f32 %v1382, %v1470
    %v1472 = vpop.f32.mrb[0].mxu0
    %v1473 = vadd.f32 %v1382, %v1472
    %1474 = vmatprep.mubr.f32.mxu0 0.0
    %1475 = vmatmul.mubr.f32.gmra.mrb[0].mxu0 %v1396
    %v1476 = vpop.f32.mrb[0].mxu0
    %v1477 = vadd.f32 %v1387, %v1476
    %v1478 = vpop.f32.mrb[0].mxu0
    %v1479 = vadd.f32 %v1387, %v1478
    %1480 = vdwg.mxu0
    %1481 = vxpose.xlu0.b32.start [1/16] %v1465, 128
    %1482 = vxpose.xlu0.b32.cont [2/16] 0.0, 128
    %1483 = vxpose.xlu0.b32.cont [3/16] 0.0, 128
    %1484 = vxpose.xlu0.b32.cont [4/16] 0.0, 128
    %1485 = vxpose.xlu0.b32.cont [5/16] 0.0, 128
    %1486 = vxpose.xlu0.b32.cont [6/16] 0.0, 128
    %1487 = vxpose.xlu0.b32.cont [7/16] 0.0, 128
    %1488 = vxpose.xlu0.b32.cont [8/16] 0.0, 128
    %1489 = vxpose.xlu0.b32.cont [9/16] 0.0, 128
    %1490 = vxpose.xlu0.b32.cont [10/16] 0.0, 128
    %1491 = vxpose.xlu0.b32.cont [11/16] 0.0, 128
    %1492 = vxpose.xlu0.b32.cont [12/16] 0.0, 128
    %1493 = vxpose.xlu0.b32.cont [13/16] 0.0, 128
    %1494 = vxpose.xlu0.b32.cont [14/16] 0.0, 128
    %1495 = vxpose.xlu0.b32.cont [15/16] 0.0, 128
    %1496 = vxpose.xlu0.b32.end [16/16] 0.0, 128
    %v1497 = vpop.trf.xlu0
    %v1498 = vpop.trf.xlu0
    %v1499 = vpop.trf.xlu0
    %v1500 = vpop.trf.xlu0
    %v1501 = vpop.trf.xlu0
    %v1502 = vpop.trf.xlu0
    %v1503 = vpop.trf.xlu0
    %v1504 = vpop.trf.xlu0
    %v1505 = vpop.trf.xlu0
    %v1506 = vpop.trf.xlu0
    %v1507 = vpop.trf.xlu0
    %v1508 = vpop.trf.xlu0
    %v1509 = vpop.trf.xlu0
    %v1510 = vpop.trf.xlu0
    %v1511 = vpop.trf.xlu0
    %v1512 = vpop.trf.xlu0
    %v1514 = vsel %vm44, %v1497, 0
    %v1517 = vsel %vm44, %v1498, 0
    %v1520 = vsel %vm44, %v1499, 0
    %v1523 = vsel %vm44, %v1500, 0
    %v1526 = vsel %vm44, %v1501, 0
    %v1529 = vsel %vm44, %v1502, 0
    %v1532 = vsel %vm44, %v1503, 0
    %v1535 = vsel %vm44, %v1504, 0
    %v1538 = vsel %vm44, %v1505, 0
    %v1541 = vsel %vm44, %v1506, 0
    %v1544 = vsel %vm44, %v1507, 0
    %v1547 = vsel %vm44, %v1508, 0
    %v1550 = vsel %vm44, %v1509, 0
    %v1553 = vsel %vm44, %v1510, 0
    %v1556 = vsel %vm44, %v1511, 0
    %v1559 = vsel %vm44, %v1512, 0
    %1561 = vmatprep.subr.mxu0 %v1473
    %1562 = vmatpush1.msra.mxu0 %v1471
    %1563 = vmatprep.subr.mxu0 0.0
    %1564 = vmatpush1.msra.mxu0 0.0
    %1565 = vmatprep.subr.mxu0 0.0
    %1566 = vmatpush1.msra.mxu0 0.0
    %1567 = vmatprep.subr.mxu0 0.0
    %1568 = vmatpush1.msra.mxu0 0.0
    %1569 = vmatprep.subr.mxu0 0.0
    %1570 = vmatpush1.msra.mxu0 0.0
    %1571 = vmatprep.subr.mxu0 0.0
    %1572 = vmatpush1.msra.mxu0 0.0
    %1573 = vmatprep.subr.mxu0 0.0
    %1574 = vmatpush1.msra.mxu0 0.0
    %1575 = vmatprep.subr.mxu0 0.0
    %1576 = vmatpush1.msra.mxu0 0.0
    %1577 = vmatprep.subr.mxu0 0.0
    %1578 = vmatpush1.msra.mxu0 0.0
    %1579 = vmatprep.subr.mxu0 0.0
    %1580 = vmatpush1.msra.mxu0 0.0
    %1581 = vmatprep.subr.mxu0 0.0
    %1582 = vmatpush1.msra.mxu0 0.0
    %1583 = vmatprep.subr.mxu0 0.0
    %1584 = vmatpush1.msra.mxu0 0.0
    %1585 = vmatprep.subr.mxu0 0.0
    %1586 = vmatpush1.msra.mxu0 0.0
    %1587 = vmatprep.subr.mxu0 0.0
    %1588 = vmatpush1.msra.mxu0 0.0
    %1589 = vmatprep.subr.mxu0 0.0
    %1590 = vmatpush1.msra.mxu0 0.0
    %1591 = vmatprep.subr.mxu0 0.0
    %1592 = vmatpush1.msra.mxu0 0.0
    %1593 = vmatprep.subr.mxu0 0.0
    %1594 = vmatpush1.msra.mxu0 0.0
    %1595 = vmatprep.subr.mxu0 0.0
    %1596 = vmatpush1.msra.mxu0 0.0
    %1597 = vmatprep.subr.mxu0 0.0
    %1598 = vmatpush1.msra.mxu0 0.0
    %1599 = vmatprep.subr.mxu0 0.0
    %1600 = vmatpush1.msra.mxu0 0.0
    %1601 = vmatprep.subr.mxu0 0.0
    %1602 = vmatpush1.msra.mxu0 0.0
    %1603 = vmatprep.subr.mxu0 0.0
    %1604 = vmatpush1.msra.mxu0 0.0
    %1605 = vmatprep.subr.mxu0 0.0
    %1606 = vmatpush1.msra.mxu0 0.0
    %1607 = vmatprep.subr.mxu0 0.0
    %1608 = vmatpush1.msra.mxu0 0.0
    %1609 = vmatprep.subr.mxu0 0.0
    %1610 = vmatpush1.msra.mxu0 0.0
    %1611 = vmatprep.subr.mxu0 0.0
    %1612 = vmatpush1.msra.mxu0 0.0
    %1613 = vmatprep.subr.mxu0 0.0
    %1614 = vmatpush1.msra.mxu0 0.0
    %1615 = vmatprep.subr.mxu0 0.0
    %1616 = vmatpush1.msra.mxu0 0.0
    %1617 = vmatprep.subr.mxu0 0.0
    %1618 = vmatpush1.msra.mxu0 0.0
    %1619 = vmatprep.subr.mxu0 0.0
    %1620 = vmatpush1.msra.mxu0 0.0
    %1621 = vmatprep.subr.mxu0 0.0
    %1622 = vmatpush1.msra.mxu0 0.0
    %1623 = vmatprep.subr.mxu0 0.0
    %1624 = vmatpush1.msra.mxu0 0.0
    %1625 = vmatprep.mubr.f32.mxu0 0.0
    %1626 = vmatmul.mubr.f32.gmra.mrb[0].mxu0 %v1514
    %v1627 = vpop.f32.mrb[0].mxu0
    %v1628 = vadd.f32 0.0, %v1627
    %v1629 = vpop.f32.mrb[0].mxu0
    %v1630 = vadd.f32 0.0, %v1629
    %1631 = vmatprep.mubr.f32.mxu0 0.0
    %1632 = vmatmul.mubr.f32.gmra.mrb[0].mxu0 %v1517
    %v1633 = vpop.f32.mrb[0].mxu0
    %v1634 = vadd.f32 0.0, %v1633
    %v1635 = vpop.f32.mrb[0].mxu0
    %v1636 = vadd.f32 0.0, %v1635
    %1637 = vmatprep.mubr.f32.mxu0 0.0
    %1638 = vmatmul.mubr.f32.gmra.mrb[0].mxu0 %v1520
    %v1639 = vpop.f32.mrb[0].mxu0
    %v1640 = vadd.f32 0.0, %v1639
    %v1641 = vpop.f32.mrb[0].mxu0
    %v1642 = vadd.f32 0.0, %v1641
    %1643 = vmatprep.mubr.f32.mxu0 0.0
    %1644 = vmatmul.mubr.f32.gmra.mrb[0].mxu0 %v1523
    %v1645 = vpop.f32.mrb[0].mxu0
    %v1646 = vadd.f32 0.0, %v1645
    %v1647 = vpop.f32.mrb[0].mxu0
    %v1648 = vadd.f32 0.0, %v1647
    %1649 = vmatprep.mubr.f32.mxu0 0.0
    %1650 = vmatmul.mubr.f32.gmra.mrb[0].mxu0 %v1526
    %v1651 = vpop.f32.mrb[0].mxu0
    %v1652 = vadd.f32 0.0, %v1651
    %v1653 = vpop.f32.mrb[0].mxu0
    %v1654 = vadd.f32 0.0, %v1653
    %1655 = vmatprep.mubr.f32.mxu0 0.0
    %1656 = vmatmul.mubr.f32.gmra.mrb[0].mxu0 %v1529
    %v1657 = vpop.f32.mrb[0].mxu0
    %v1658 = vadd.f32 0.0, %v1657
    %v1659 = vpop.f32.mrb[0].mxu0
    %v1660 = vadd.f32 0.0, %v1659
    %1661 = vmatprep.mubr.f32.mxu0 0.0
    %1662 = vmatmul.mubr.f32.gmra.mrb[0].mxu0 %v1532
    %v1663 = vpop.f32.mrb[0].mxu0
    %v1664 = vadd.f32 0.0, %v1663
    %v1665 = vpop.f32.mrb[0].mxu0
    %v1666 = vadd.f32 0.0, %v1665
    %1667 = vmatprep.mubr.f32.mxu0 0.0
    %1668 = vmatmul.mubr.f32.gmra.mrb[0].mxu0 %v1535
    %v1669 = vpop.f32.mrb[0].mxu0
    %v1670 = vadd.f32 0.0, %v1669
    %v1671 = vpop.f32.mrb[0].mxu0
    %v1672 = vadd.f32 0.0, %v1671
    %1673 = vmatprep.mubr.f32.mxu0 0.0
    %1674 = vmatmul.mubr.f32.gmra.mrb[0].mxu0 %v1538
    %v1675 = vpop.f32.mrb[0].mxu0
    %v1676 = vadd.f32 0.0, %v1675
    %v1677 = vpop.f32.mrb[0].mxu0
    %v1678 = vadd.f32 0.0, %v1677
    %1679 = vmatprep.mubr.f32.mxu0 0.0
    %1680 = vmatmul.mubr.f32.gmra.mrb[0].mxu0 %v1541
    %v1681 = vpop.f32.mrb[0].mxu0
    %v1682 = vadd.f32 0.0, %v1681
    %v1683 = vpop.f32.mrb[0].mxu0
    %v1684 = vadd.f32 0.0, %v1683
    %1685 = vmatprep.mubr.f32.mxu0 0.0
    %1686 = vmatmul.mubr.f32.gmra.mrb[0].mxu0 %v1544
    %v1687 = vpop.f32.mrb[0].mxu0
    %v1688 = vadd.f32 0.0, %v1687
    %v1689 = vpop.f32.mrb[0].mxu0
    %v1690 = vadd.f32 0.0, %v1689
    %1691 = vmatprep.mubr.f32.mxu0 0.0
    %1692 = vmatmul.mubr.f32.gmra.mrb[0].mxu0 %v1547
    %v1693 = vpop.f32.mrb[0].mxu0
    %v1694 = vadd.f32 0.0, %v1693
    %v1695 = vpop.f32.mrb[0].mxu0
    %v1696 = vadd.f32 0.0, %v1695
    %1697 = vmatprep.mubr.f32.mxu0 0.0
    %1698 = vmatmul.mubr.f32.gmra.mrb[0].mxu0 %v1550
    %v1699 = vpop.f32.mrb[0].mxu0
    %v1700 = vadd.f32 0.0, %v1699
    %v1701 = vpop.f32.mrb[0].mxu0
    %v1702 = vadd.f32 0.0, %v1701
    %1703 = vmatprep.mubr.f32.mxu0 0.0
    %1704 = vmatmul.mubr.f32.gmra.mrb[0].mxu0 %v1553
    %v1705 = vpop.f32.mrb[0].mxu0
    %v1706 = vadd.f32 0.0, %v1705
    %v1707 = vpop.f32.mrb[0].mxu0
    %v1708 = vadd.f32 0.0, %v1707
    %1709 = vmatprep.mubr.f32.mxu0 0.0
    %1710 = vmatmul.mubr.f32.gmra.mrb[0].mxu0 %v1556
    %v1711 = vpop.f32.mrb[0].mxu0
    %v1712 = vadd.f32 0.0, %v1711
    %v1713 = vpop.f32.mrb[0].mxu0
    %v1714 = vadd.f32 0.0, %v1713
    %1715 = vmatprep.mubr.f32.mxu0 0.0
    %1716 = vmatmul.mubr.f32.gmra.mrb[0].mxu0 %v1559
    %v1717 = vpop.f32.mrb[0].mxu0
    %v1718 = vadd.f32 0.0, %v1717
    %v1719 = vpop.f32.mrb[0].mxu0
    %v1720 = vadd.f32 0.0, %v1719
    %1721 = vdwg.mxu0
    %v1722 = vmax.f32 %v1628, %v1630
    %1723 = vmax.xlane.f32.xlu0 %v1722
    %v1724 = vpop.xlane.xlu0 %1723
    %v1725 = vmax.f32 %v1634, %v1636
    %1726 = vmax.xlane.f32.xlu0 %v1725
    %v1727 = vpop.xlane.xlu0 %1726
    %v1728 = vmax.f32 %v1640, %v1642
    %1729 = vmax.xlane.f32.xlu0 %v1728
    %v1730 = vpop.xlane.xlu0 %1729
    %v1731 = vmax.f32 %v1646, %v1648
    %1732 = vmax.xlane.f32.xlu0 %v1731
    %v1733 = vpop.xlane.xlu0 %1732
    %v1734 = vmax.f32 %v1652, %v1654
    %1735 = vmax.xlane.f32.xlu0 %v1734
    %v1736 = vpop.xlane.xlu0 %1735
    %v1737 = vmax.f32 %v1658, %v1660
    %1738 = vmax.xlane.f32.xlu0 %v1737
    %v1739 = vpop.xlane.xlu0 %1738
    %v1740 = vmax.f32 %v1664, %v1666
    %1741 = vmax.xlane.f32.xlu0 %v1740
    %v1742 = vpop.xlane.xlu0 %1741
    %v1743 = vmax.f32 %v1670, %v1672
    %1744 = vmax.xlane.f32.xlu0 %v1743
    %v1745 = vpop.xlane.xlu0 %1744
    %v1746 = vmax.f32 %v1676, %v1678
    %1747 = vmax.xlane.f32.xlu0 %v1746
    %v1748 = vpop.xlane.xlu0 %1747
    %v1749 = vmax.f32 %v1682, %v1684
    %1750 = vmax.xlane.f32.xlu0 %v1749
    %v1751 = vpop.xlane.xlu0 %1750
    %v1752 = vmax.f32 %v1688, %v1690
    %1753 = vmax.xlane.f32.xlu0 %v1752
    %v1754 = vpop.xlane.xlu0 %1753
    %v1755 = vmax.f32 %v1694, %v1696
    %1756 = vmax.xlane.f32.xlu0 %v1755
    %v1757 = vpop.xlane.xlu0 %1756
    %v1758 = vmax.f32 %v1700, %v1702
    %1759 = vmax.xlane.f32.xlu0 %v1758
    %v1760 = vpop.xlane.xlu0 %1759
    %v1761 = vmax.f32 %v1706, %v1708
    %1762 = vmax.xlane.f32.xlu0 %v1761
    %v1763 = vpop.xlane.xlu0 %1762
    %v1764 = vmax.f32 %v1712, %v1714
    %1765 = vmax.xlane.f32.xlu0 %v1764
    %v1766 = vpop.xlane.xlu0 %1765
    %v1767 = vmax.f32 %v1718, %v1720
    %1768 = vmax.xlane.f32.xlu0 %v1767
    %v1769 = vpop.xlane.xlu0 %1768
    %v1770 = vsub.f32 %v1628, %v1724
    %v1771 = vsub.f32 %v1630, %v1724
    %v1772 = vsub.f32 %v1634, %v1727
    %v1773 = vsub.f32 %v1636, %v1727
    %v1774 = vsub.f32 %v1640, %v1730
    %v1775 = vsub.f32 %v1642, %v1730
    %v1776 = vsub.f32 %v1646, %v1733
    %v1777 = vsub.f32 %v1648, %v1733
    %v1778 = vsub.f32 %v1652, %v1736
    %v1779 = vsub.f32 %v1654, %v1736
    %v1780 = vsub.f32 %v1658, %v1739
    %v1781 = vsub.f32 %v1660, %v1739
    %v1782 = vsub.f32 %v1664, %v1742
    %v1783 = vsub.f32 %v1666, %v1742
    %v1784 = vsub.f32 %v1670, %v1745
    %v1785 = vsub.f32 %v1672, %v1745
    %v1786 = vsub.f32 %v1676, %v1748
    %v1787 = vsub.f32 %v1678, %v1748
    %v1788 = vsub.f32 %v1682, %v1751
    %v1789 = vsub.f32 %v1684, %v1751
    %v1790 = vsub.f32 %v1688, %v1754
    %v1791 = vsub.f32 %v1690, %v1754
    %v1792 = vsub.f32 %v1694, %v1757
    %v1793 = vsub.f32 %v1696, %v1757
    %v1794 = vsub.f32 %v1700, %v1760
    %v1795 = vsub.f32 %v1702, %v1760
    %v1796 = vsub.f32 %v1706, %v1763
    %v1797 = vsub.f32 %v1708, %v1763
    %v1798 = vsub.f32 %v1712, %v1766
    %v1799 = vsub.f32 %v1714, %v1766
    %v1800 = vsub.f32 %v1718, %v1769
    %v1801 = vsub.f32 %v1720, %v1769
    %v1802 = vmul.f32 %v1770, 1.442695
    %v1803 = vpow.pop %v1802
    %v1804 = vmul.f32 %v1771, 1.442695
    %v1805 = vpow.pop %v1804
    %v1806 = vmul.f32 %v1772, 1.442695
    %v1807 = vpow.pop %v1806
    %v1808 = vmul.f32 %v1773, 1.442695
    %v1809 = vpow.pop %v1808
    %v1810 = vmul.f32 %v1774, 1.442695
    %v1811 = vpow.pop %v1810
    %v1812 = vmul.f32 %v1775, 1.442695
    %v1813 = vpow.pop %v1812
    %v1814 = vmul.f32 %v1776, 1.442695
    %v1815 = vpow.pop %v1814
    %v1816 = vmul.f32 %v1777, 1.442695
    %v1817 = vpow.pop %v1816
    %v1818 = vmul.f32 %v1778, 1.442695
    %v1819 = vpow.pop %v1818
    %v1820 = vmul.f32 %v1779, 1.442695
    %v1821 = vpow.pop %v1820
    %v1822 = vmul.f32 %v1780, 1.442695
    %v1823 = vpow.pop %v1822
    %v1824 = vmul.f32 %v1781, 1.442695
    %v1825 = vpow.pop %v1824
    %v1826 = vmul.f32 %v1782, 1.442695
    %v1827 = vpow.pop %v1826
    %v1828 = vmul.f32 %v1783, 1.442695
    %v1829 = vpow.pop %v1828
    %v1830 = vmul.f32 %v1784, 1.442695
    %v1831 = vpow.pop %v1830
    %v1832 = vmul.f32 %v1785, 1.442695
    %v1833 = vpow.pop %v1832
    %v1834 = vmul.f32 %v1786, 1.442695
    %v1835 = vpow.pop %v1834
    %v1836 = vmul.f32 %v1787, 1.442695
    %v1837 = vpow.pop %v1836
    %v1838 = vmul.f32 %v1788, 1.442695
    %v1839 = vpow.pop %v1838
    %v1840 = vmul.f32 %v1789, 1.442695
    %v1841 = vpow.pop %v1840
    %v1842 = vmul.f32 %v1790, 1.442695
    %v1843 = vpow.pop %v1842
    %v1844 = vmul.f32 %v1791, 1.442695
    %v1845 = vpow.pop %v1844
    %v1846 = vmul.f32 %v1792, 1.442695
    %v1847 = vpow.pop %v1846
    %v1848 = vmul.f32 %v1793, 1.442695
    %v1849 = vpow.pop %v1848
    %v1850 = vmul.f32 %v1794, 1.442695
    %v1851 = vpow.pop %v1850
    %v1852 = vmul.f32 %v1795, 1.442695
    %v1853 = vpow.pop %v1852
    %v1854 = vmul.f32 %v1796, 1.442695
    %v1855 = vpow.pop %v1854
    %v1856 = vmul.f32 %v1797, 1.442695
    %v1857 = vpow.pop %v1856
    %v1858 = vmul.f32 %v1798, 1.442695
    %v1859 = vpow.pop %v1858
    %v1860 = vmul.f32 %v1799, 1.442695
    %v1861 = vpow.pop %v1860
    %v1862 = vmul.f32 %v1800, 1.442695
    %v1863 = vpow.pop %v1862
    %v1864 = vmul.f32 %v1801, 1.442695
    %v1865 = vpow.pop %v1864
    %1866 = vmatprep.subr.mxu0 %v1805
    %1867 = vmatpush1.xpose.msra.mxu0 %v1803
    %1868 = vmatprep.subr.mxu0 %v1809
    %1869 = vmatpush1.xpose.msra.mxu0 %v1807
    %1870 = vmatprep.subr.mxu0 %v1813
    %1871 = vmatpush1.xpose.msra.mxu0 %v1811
    %1872 = vmatprep.subr.mxu0 %v1817
    %1873 = vmatpush1.xpose.msra.mxu0 %v1815
    %1874 = vmatprep.subr.mxu0 %v1821
    %1875 = vmatpush1.xpose.msra.mxu0 %v1819
    %1876 = vmatprep.subr.mxu0 %v1825
    %1877 = vmatpush1.xpose.msra.mxu0 %v1823
    %1878 = vmatprep.subr.mxu0 %v1829
    %1879 = vmatpush1.xpose.msra.mxu0 %v1827
    %1880 = vmatprep.subr.mxu0 %v1833
    %1881 = vmatpush1.xpose.msra.mxu0 %v1831
    %1882 = vmatprep.subr.mxu0 %v1837
    %1883 = vmatpush1.xpose.msra.mxu0 %v1835
    %1884 = vmatprep.subr.mxu0 %v1841
    %1885 = vmatpush1.xpose.msra.mxu0 %v1839
    %1886 = vmatprep.subr.mxu0 %v1845
    %1887 = vmatpush1.xpose.msra.mxu0 %v1843
    %1888 = vmatprep.subr.mxu0 %v1849
    %1889 = vmatpush1.xpose.msra.mxu0 %v1847
    %1890 = vmatprep.subr.mxu0 %v1853
    %1891 = vmatpush1.xpose.msra.mxu0 %v1851
    %1892 = vmatprep.subr.mxu0 %v1857
    %1893 = vmatpush1.xpose.msra.mxu0 %v1855
    %1894 = vmatprep.subr.mxu0 %v1861
    %1895 = vmatpush1.xpose.msra.mxu0 %v1859
    %1896 = vmatprep.subr.mxu0 %v1865
    %1897 = vmatpush1.xpose.msra.mxu0 %v1863
    %1898 = vmatprep.subr.mxu0 0.0
    %1899 = vmatpush1.xpose.msra.mxu0 0.0
    %1900 = vmatprep.subr.mxu0 0.0
    %1901 = vmatpush1.xpose.msra.mxu0 0.0
    %1902 = vmatprep.subr.mxu0 0.0
    %1903 = vmatpush1.xpose.msra.mxu0 0.0
    %1904 = vmatprep.subr.mxu0 0.0
    %1905 = vmatpush1.xpose.msra.mxu0 0.0
    %1906 = vmatprep.subr.mxu0 0.0
    %1907 = vmatpush1.xpose.msra.mxu0 0.0
    %1908 = vmatprep.subr.mxu0 0.0
    %1909 = vmatpush1.xpose.msra.mxu0 0.0
    %1910 = vmatprep.subr.mxu0 0.0
    %1911 = vmatpush1.xpose.msra.mxu0 0.0
    %1912 = vmatprep.subr.mxu0 0.0
    %1913 = vmatpush1.xpose.msra.mxu0 0.0
    %1914 = vmatprep.subr.mxu0 0.0
    %1915 = vmatpush1.xpose.msra.mxu0 0.0
    %1916 = vmatprep.subr.mxu0 0.0
    %1917 = vmatpush1.xpose.msra.mxu0 0.0
    %1918 = vmatprep.subr.mxu0 0.0
    %1919 = vmatpush1.xpose.msra.mxu0 0.0
    %1920 = vmatprep.subr.mxu0 0.0
    %1921 = vmatpush1.xpose.msra.mxu0 0.0
    %1922 = vmatprep.subr.mxu0 0.0
    %1923 = vmatpush1.xpose.msra.mxu0 0.0
    %1924 = vmatprep.subr.mxu0 0.0
    %1925 = vmatpush1.xpose.msra.mxu0 0.0
    %1926 = vmatprep.subr.mxu0 0.0
    %1927 = vmatpush1.xpose.msra.mxu0 0.0
    %1928 = vmatprep.subr.mxu0 0.0
    %1929 = vmatpush1.xpose.msra.mxu0 0.0
    %1930 = vmatprep.mubr.f32.mxu0 %v1479
    %1931 = vmatmul.mubr.f32.gmra.mrb[0].mxu0 %v1477
    %v1932 = vpop.f32.mrb[0].mxu0
    %v1933 = vadd.f32 0.0, %v1932
    %v1934 = vpop.f32.mrb[0].mxu0
    %1935 = vdwg.mxu0
    %1936 = vmatprep.subr.mxu0 %v1805
    %1937 = vmatpush1.xpose.msra.mxu0 %v1803
    %1938 = vmatprep.subr.mxu0 %v1809
    %1939 = vmatpush1.xpose.msra.mxu0 %v1807
    %1940 = vmatprep.subr.mxu0 %v1813
    %1941 = vmatpush1.xpose.msra.mxu0 %v1811
    %1942 = vmatprep.subr.mxu0 %v1817
    %1943 = vmatpush1.xpose.msra.mxu0 %v1815
    %1944 = vmatprep.subr.mxu0 %v1821
    %1945 = vmatpush1.xpose.msra.mxu0 %v1819
    %1946 = vmatprep.subr.mxu0 %v1825
    %1947 = vmatpush1.xpose.msra.mxu0 %v1823
    %1948 = vmatprep.subr.mxu0 %v1829
    %1949 = vmatpush1.xpose.msra.mxu0 %v1827
    %1950 = vmatprep.subr.mxu0 %v1833
    %1951 = vmatpush1.xpose.msra.mxu0 %v1831
    %1952 = vmatprep.subr.mxu0 %v1837
    %1953 = vmatpush1.xpose.msra.mxu0 %v1835
    %1954 = vmatprep.subr.mxu0 %v1841
    %1955 = vmatpush1.xpose.msra.mxu0 %v1839
    %1956 = vmatprep.subr.mxu0 %v1845
    %1957 = vmatpush1.xpose.msra.mxu0 %v1843
    %1958 = vmatprep.subr.mxu0 %v1849
    %1959 = vmatpush1.xpose.msra.mxu0 %v1847
    %1960 = vmatprep.subr.mxu0 %v1853
    %1961 = vmatpush1.xpose.msra.mxu0 %v1851
    %1962 = vmatprep.subr.mxu0 %v1857
    %1963 = vmatpush1.xpose.msra.mxu0 %v1855
    %1964 = vmatprep.subr.mxu0 %v1861
    %1965 = vmatpush1.xpose.msra.mxu0 %v1859
    %1966 = vmatprep.subr.mxu0 %v1865
    %1967 = vmatpush1.xpose.msra.mxu0 %v1863
    %1968 = vmatprep.subr.mxu0 0.0
    %1969 = vmatpush1.xpose.msra.mxu0 0.0
    %1970 = vmatprep.subr.mxu0 0.0
    %1971 = vmatpush1.xpose.msra.mxu0 0.0
    %1972 = vmatprep.subr.mxu0 0.0
    %1973 = vmatpush1.xpose.msra.mxu0 0.0
    %1974 = vmatprep.subr.mxu0 0.0
    %1975 = vmatpush1.xpose.msra.mxu0 0.0
    %1976 = vmatprep.subr.mxu0 0.0
    %1977 = vmatpush1.xpose.msra.mxu0 0.0
    %1978 = vmatprep.subr.mxu0 0.0
    %1979 = vmatpush1.xpose.msra.mxu0 0.0
    %1980 = vmatprep.subr.mxu0 0.0
    %1981 = vmatpush1.xpose.msra.mxu0 0.0
    %1982 = vmatprep.subr.mxu0 0.0
    %1983 = vmatpush1.xpose.msra.mxu0 0.0
    %1984 = vmatprep.subr.mxu0 0.0
    %1985 = vmatpush1.xpose.msra.mxu0 0.0
    %1986 = vmatprep.subr.mxu0 0.0
    %1987 = vmatpush1.xpose.msra.mxu0 0.0
    %1988 = vmatprep.subr.mxu0 0.0
    %1989 = vmatpush1.xpose.msra.mxu0 0.0
    %1990 = vmatprep.subr.mxu0 0.0
    %1991 = vmatpush1.xpose.msra.mxu0 0.0
    %1992 = vmatprep.subr.mxu0 0.0
    %1993 = vmatpush1.xpose.msra.mxu0 0.0
    %1994 = vmatprep.subr.mxu0 0.0
    %1995 = vmatpush1.xpose.msra.mxu0 0.0
    %1996 = vmatprep.subr.mxu0 0.0
    %1997 = vmatpush1.xpose.msra.mxu0 0.0
    %1998 = vmatprep.subr.mxu0 0.0
    %1999 = vmatpush1.xpose.msra.mxu0 0.0
    %2000 = vmatprep.mubr.f32.mxu0 1.0
    %2001 = vmatmul.mubr.f32.gmra.mrb[0].mxu0 1.0
    %v2002 = vpop.f32.mrb[0].mxu0
    %v2003 = vadd.f32 0.0, %v2002
    %v2004 = vpop.f32.mrb[0].mxu0
    %2005 = vdwg.mxu0
    %v2006 = vrcp.pop %v2003
    %v2007 = vlaneseq
    %v2008 = vshrl.u32 %v2007, 7
    %v2009 = vsub.s32 0, %v2008
    %v2010 = vrot.slane %v2006, %v2009
    %v2011 = vmul.f32 %v1933, %v2010
    %v2012 = vld [vmem:[%s3] sm:$0xff]
    %v2014 = vsel %vm44, %v2012, 0
    %2016 = vmatprep.subr.mxu0 0.0
    %2017 = vmatpush1.msra.mxu0 %v2011
    %2018 = vmatprep.subr.mxu0 0.0
    %2019 = vmatpush1.msra.mxu0 0.0
    %2020 = vmatprep.subr.mxu0 0.0
    %2021 = vmatpush1.msra.mxu0 0.0
    %2022 = vmatprep.subr.mxu0 0.0
    %2023 = vmatpush1.msra.mxu0 0.0
    %2024 = vmatprep.subr.mxu0 0.0
    %2025 = vmatpush1.msra.mxu0 0.0
    %2026 = vmatprep.subr.mxu0 0.0
    %2027 = vmatpush1.msra.mxu0 0.0
    %2028 = vmatprep.subr.mxu0 0.0
    %2029 = vmatpush1.msra.mxu0 0.0
    %2030 = vmatprep.subr.mxu0 0.0
    %2031 = vmatpush1.msra.mxu0 0.0
    %2032 = vmatprep.subr.mxu0 0.0
    %2033 = vmatpush1.msra.mxu0 0.0
    %2034 = vmatprep.subr.mxu0 0.0
    %2035 = vmatpush1.msra.mxu0 0.0
    %2036 = vmatprep.subr.mxu0 0.0
    %2037 = vmatpush1.msra.mxu0 0.0
    %2038 = vmatprep.subr.mxu0 0.0
    %2039 = vmatpush1.msra.mxu0 0.0
    %2040 = vmatprep.subr.mxu0 0.0
    %2041 = vmatpush1.msra.mxu0 0.0
    %2042 = vmatprep.subr.mxu0 0.0
    %2043 = vmatpush1.msra.mxu0 0.0
    %2044 = vmatprep.subr.mxu0 0.0
    %2045 = vmatpush1.msra.mxu0 0.0
    %2046 = vmatprep.subr.mxu0 0.0
    %2047 = vmatpush1.msra.mxu0 0.0
    %2048 = vmatprep.subr.mxu0 0.0
    %2049 = vmatpush1.msra.mxu0 0.0
    %2050 = vmatprep.subr.mxu0 0.0
    %2051 = vmatpush1.msra.mxu0 0.0
    %2052 = vmatprep.subr.mxu0 0.0
    %2053 = vmatpush1.msra.mxu0 0.0
    %2054 = vmatprep.subr.mxu0 0.0
    %2055 = vmatpush1.msra.mxu0 0.0
    %2056 = vmatprep.subr.mxu0 0.0
    %2057 = vmatpush1.msra.mxu0 0.0
    %2058 = vmatprep.subr.mxu0 0.0
    %2059 = vmatpush1.msra.mxu0 0.0
    %2060 = vmatprep.subr.mxu0 0.0
    %2061 = vmatpush1.msra.mxu0 0.0
    %2062 = vmatprep.subr.mxu0 0.0
    %2063 = vmatpush1.msra.mxu0 0.0
    %2064 = vmatprep.subr.mxu0 0.0
    %2065 = vmatpush1.msra.mxu0 0.0
    %2066 = vmatprep.subr.mxu0 0.0
    %2067 = vmatpush1.msra.mxu0 0.0
    %2068 = vmatprep.subr.mxu0 0.0
    %2069 = vmatpush1.msra.mxu0 0.0
    %2070 = vmatprep.subr.mxu0 0.0
    %2071 = vmatpush1.msra.mxu0 0.0
    %2072 = vmatprep.subr.mxu0 0.0
    %2073 = vmatpush1.msra.mxu0 0.0
    %2074 = vmatprep.subr.mxu0 0.0
    %2075 = vmatpush1.msra.mxu0 0.0
    %2076 = vmatprep.subr.mxu0 0.0
    %2077 = vmatpush1.msra.mxu0 0.0
    %2078 = vmatprep.subr.mxu0 0.0
    %2079 = vmatpush1.msra.mxu0 0.0
    %2080 = vmatprep.mubr.f32.mxu0 0.0
    %2081 = vmatmul.mubr.f32.gmra.mrb[0].mxu0 %v2014
    %v2082 = vpop.f32.mrb[0].mxu0
    %v2083 = vadd.f32 0.0, %v2082
    %v2084 = vpop.f32.mrb[0].mxu0
    %2085 = vdwg.mxu0
    %v2086 = vld [vmem:[%s4] sm:$0xff]
    %2088 = vset.pattern.permute.xlu0 0
    %2089 = vperm.xlu0 %2088, %v2086
    %v2090 = vpop.permute.xlu0 %2089
    %v2092 = vadd.f32 %v1366, %v2090
    %v2093 = vadd.f32 %v2092, %v2083
    %s2094 = scalar_lea.vmem [#allocation2], 16
    %2095 = vst [vmem:[%s2094] sm:$0xff] %v2093
    %2096 = vxpose.xlu0.b32.start [1/16] %v1467, 128
    %2097 = vxpose.xlu0.b32.cont [2/16] 0.0, 128
    %2098 = vxpose.xlu0.b32.cont [3/16] 0.0, 128
    %2099 = vxpose.xlu0.b32.cont [4/16] 0.0, 128
    %2100 = vxpose.xlu0.b32.cont [5/16] 0.0, 128
    %2101 = vxpose.xlu0.b32.cont [6/16] 0.0, 128
    %2102 = vxpose.xlu0.b32.cont [7/16] 0.0, 128
    %2103 = vxpose.xlu0.b32.cont [8/16] 0.0, 128
    %2104 = vxpose.xlu0.b32.cont [9/16] 0.0, 128
    %2105 = vxpose.xlu0.b32.cont [10/16] 0.0, 128
    %2106 = vxpose.xlu0.b32.cont [11/16] 0.0, 128
    %2107 = vxpose.xlu0.b32.cont [12/16] 0.0, 128
    %2108 = vxpose.xlu0.b32.cont [13/16] 0.0, 128
    %2109 = vxpose.xlu0.b32.cont [14/16] 0.0, 128
    %2110 = vxpose.xlu0.b32.cont [15/16] 0.0, 128
    %2111 = vxpose.xlu0.b32.end [16/16] 0.0, 128
    %v2112 = vpop.trf.xlu0
    %v2113 = vpop.trf.xlu0
    %v2114 = vpop.trf.xlu0
    %v2115 = vpop.trf.xlu0
    %v2116 = vpop.trf.xlu0
    %v2117 = vpop.trf.xlu0
    %v2118 = vpop.trf.xlu0
    %v2119 = vpop.trf.xlu0
    %v2120 = vpop.trf.xlu0
    %v2121 = vpop.trf.xlu0
    %v2122 = vpop.trf.xlu0
    %v2123 = vpop.trf.xlu0
    %v2124 = vpop.trf.xlu0
    %v2125 = vpop.trf.xlu0
    %v2126 = vpop.trf.xlu0
    %v2127 = vpop.trf.xlu0
    %v2129 = vsel %vm44, %v2112, 0
    %v2132 = vsel %vm44, %v2113, 0
    %v2135 = vsel %vm44, %v2114, 0
    %v2138 = vsel %vm44, %v2115, 0
    %v2141 = vsel %vm44, %v2116, 0
    %v2144 = vsel %vm44, %v2117, 0
    %v2147 = vsel %vm44, %v2118, 0
    %v2150 = vsel %vm44, %v2119, 0
    %v2153 = vsel %vm44, %v2120, 0
    %v2156 = vsel %vm44, %v2121, 0
    %v2159 = vsel %vm44, %v2122, 0
    %v2162 = vsel %vm44, %v2123, 0
    %v2165 = vsel %vm44, %v2124, 0
    %v2168 = vsel %vm44, %v2125, 0
    %v2171 = vsel %vm44, %v2126, 0
    %v2174 = vsel %vm44, %v2127, 0
    %2176 = vmatprep.subr.mxu0 %v1473
    %2177 = vmatpush1.msra.mxu0 %v1471
    %2178 = vmatprep.subr.mxu0 0.0
    %2179 = vmatpush1.msra.mxu0 0.0
    %2180 = vmatprep.subr.mxu0 0.0
    %2181 = vmatpush1.msra.mxu0 0.0
    %2182 = vmatprep.subr.mxu0 0.0
    %2183 = vmatpush1.msra.mxu0 0.0
    %2184 = vmatprep.subr.mxu0 0.0
    %2185 = vmatpush1.msra.mxu0 0.0
    %2186 = vmatprep.subr.mxu0 0.0
    %2187 = vmatpush1.msra.mxu0 0.0
    %2188 = vmatprep.subr.mxu0 0.0
    %2189 = vmatpush1.msra.mxu0 0.0
    %2190 = vmatprep.subr.mxu0 0.0
    %2191 = vmatpush1.msra.mxu0 0.0
    %2192 = vmatprep.subr.mxu0 0.0
    %2193 = vmatpush1.msra.mxu0 0.0
    %2194 = vmatprep.subr.mxu0 0.0
    %2195 = vmatpush1.msra.mxu0 0.0
    %2196 = vmatprep.subr.mxu0 0.0
    %2197 = vmatpush1.msra.mxu0 0.0
    %2198 = vmatprep.subr.mxu0 0.0
    %2199 = vmatpush1.msra.mxu0 0.0
    %2200 = vmatprep.subr.mxu0 0.0
    %2201 = vmatpush1.msra.mxu0 0.0
    %2202 = vmatprep.subr.mxu0 0.0
    %2203 = vmatpush1.msra.mxu0 0.0
    %2204 = vmatprep.subr.mxu0 0.0
    %2205 = vmatpush1.msra.mxu0 0.0
    %2206 = vmatprep.subr.mxu0 0.0
    %2207 = vmatpush1.msra.mxu0 0.0
    %2208 = vmatprep.subr.mxu0 0.0
    %2209 = vmatpush1.msra.mxu0 0.0
    %2210 = vmatprep.subr.mxu0 0.0
    %2211 = vmatpush1.msra.mxu0 0.0
    %2212 = vmatprep.subr.mxu0 0.0
    %2213 = vmatpush1.msra.mxu0 0.0
    %2214 = vmatprep.subr.mxu0 0.0
    %2215 = vmatpush1.msra.mxu0 0.0
    %2216 = vmatprep.subr.mxu0 0.0
    %2217 = vmatpush1.msra.mxu0 0.0
    %2218 = vmatprep.subr.mxu0 0.0
    %2219 = vmatpush1.msra.mxu0 0.0
    %2220 = vmatprep.subr.mxu0 0.0
    %2221 = vmatpush1.msra.mxu0 0.0
    %2222 = vmatprep.subr.mxu0 0.0
    %2223 = vmatpush1.msra.mxu0 0.0
    %2224 = vmatprep.subr.mxu0 0.0
    %2225 = vmatpush1.msra.mxu0 0.0
    %2226 = vmatprep.subr.mxu0 0.0
    %2227 = vmatpush1.msra.mxu0 0.0
    %2228 = vmatprep.subr.mxu0 0.0
    %2229 = vmatpush1.msra.mxu0 0.0
    %2230 = vmatprep.subr.mxu0 0.0
    %2231 = vmatpush1.msra.mxu0 0.0
    %2232 = vmatprep.subr.mxu0 0.0
    %2233 = vmatpush1.msra.mxu0 0.0
    %2234 = vmatprep.subr.mxu0 0.0
    %2235 = vmatpush1.msra.mxu0 0.0
    %2236 = vmatprep.subr.mxu0 0.0
    %2237 = vmatpush1.msra.mxu0 0.0
    %2238 = vmatprep.subr.mxu0 0.0
    %2239 = vmatpush1.msra.mxu0 0.0
    %2240 = vmatprep.mubr.f32.mxu0 0.0
    %2241 = vmatmul.mubr.f32.gmra.mrb[0].mxu0 %v2129
    %v2242 = vpop.f32.mrb[0].mxu0
    %v2243 = vadd.f32 0.0, %v2242
    %v2244 = vpop.f32.mrb[0].mxu0
    %v2245 = vadd.f32 0.0, %v2244
    %2246 = vmatprep.mubr.f32.mxu0 0.0
    %2247 = vmatmul.mubr.f32.gmra.mrb[0].mxu0 %v2132
    %v2248 = vpop.f32.mrb[0].mxu0
    %v2249 = vadd.f32 0.0, %v2248
    %v2250 = vpop.f32.mrb[0].mxu0
    %v2251 = vadd.f32 0.0, %v2250
    %2252 = vmatprep.mubr.f32.mxu0 0.0
    %2253 = vmatmul.mubr.f32.gmra.mrb[0].mxu0 %v2135
    %v2254 = vpop.f32.mrb[0].mxu0
    %v2255 = vadd.f32 0.0, %v2254
    %v2256 = vpop.f32.mrb[0].mxu0
    %v2257 = vadd.f32 0.0, %v2256
    %2258 = vmatprep.mubr.f32.mxu0 0.0
    %2259 = vmatmul.mubr.f32.gmra.mrb[0].mxu0 %v2138
    %v2260 = vpop.f32.mrb[0].mxu0
    %v2261 = vadd.f32 0.0, %v2260
    %v2262 = vpop.f32.mrb[0].mxu0
    %v2263 = vadd.f32 0.0, %v2262
    %2264 = vmatprep.mubr.f32.mxu0 0.0
    %2265 = vmatmul.mubr.f32.gmra.mrb[0].mxu0 %v2141
    %v2266 = vpop.f32.mrb[0].mxu0
    %v2267 = vadd.f32 0.0, %v2266
    %v2268 = vpop.f32.mrb[0].mxu0
    %v2269 = vadd.f32 0.0, %v2268
    %2270 = vmatprep.mubr.f32.mxu0 0.0
    %2271 = vmatmul.mubr.f32.gmra.mrb[0].mxu0 %v2144
    %v2272 = vpop.f32.mrb[0].mxu0
    %v2273 = vadd.f32 0.0, %v2272
    %v2274 = vpop.f32.mrb[0].mxu0
    %v2275 = vadd.f32 0.0, %v2274
    %2276 = vmatprep.mubr.f32.mxu0 0.0
    %2277 = vmatmul.mubr.f32.gmra.mrb[0].mxu0 %v2147
    %v2278 = vpop.f32.mrb[0].mxu0
    %v2279 = vadd.f32 0.0, %v2278
    %v2280 = vpop.f32.mrb[0].mxu0
    %v2281 = vadd.f32 0.0, %v2280
    %2282 = vmatprep.mubr.f32.mxu0 0.0
    %2283 = vmatmul.mubr.f32.gmra.mrb[0].mxu0 %v2150
    %v2284 = vpop.f32.mrb[0].mxu0
    %v2285 = vadd.f32 0.0, %v2284
    %v2286 = vpop.f32.mrb[0].mxu0
    %v2287 = vadd.f32 0.0, %v2286
    %2288 = vmatprep.mubr.f32.mxu0 0.0
    %2289 = vmatmul.mubr.f32.gmra.mrb[0].mxu0 %v2153
    %v2290 = vpop.f32.mrb[0].mxu0
    %v2291 = vadd.f32 0.0, %v2290
    %v2292 = vpop.f32.mrb[0].mxu0
    %v2293 = vadd.f32 0.0, %v2292
    %2294 = vmatprep.mubr.f32.mxu0 0.0
    %2295 = vmatmul.mubr.f32.gmra.mrb[0].mxu0 %v2156
    %v2296 = vpop.f32.mrb[0].mxu0
    %v2297 = vadd.f32 0.0, %v2296
    %v2298 = vpop.f32.mrb[0].mxu0
    %v2299 = vadd.f32 0.0, %v2298
    %2300 = vmatprep.mubr.f32.mxu0 0.0
    %2301 = vmatmul.mubr.f32.gmra.mrb[0].mxu0 %v2159
    %v2302 = vpop.f32.mrb[0].mxu0
    %v2303 = vadd.f32 0.0, %v2302
    %v2304 = vpop.f32.mrb[0].mxu0
    %v2305 = vadd.f32 0.0, %v2304
    %2306 = vmatprep.mubr.f32.mxu0 0.0
    %2307 = vmatmul.mubr.f32.gmra.mrb[0].mxu0 %v2162
    %v2308 = vpop.f32.mrb[0].mxu0
    %v2309 = vadd.f32 0.0, %v2308
    %v2310 = vpop.f32.mrb[0].mxu0
    %v2311 = vadd.f32 0.0, %v2310
    %2312 = vmatprep.mubr.f32.mxu0 0.0
    %2313 = vmatmul.mubr.f32.gmra.mrb[0].mxu0 %v2165
    %v2314 = vpop.f32.mrb[0].mxu0
    %v2315 = vadd.f32 0.0, %v2314
    %v2316 = vpop.f32.mrb[0].mxu0
    %v2317 = vadd.f32 0.0, %v2316
    %2318 = vmatprep.mubr.f32.mxu0 0.0
    %2319 = vmatmul.mubr.f32.gmra.mrb[0].mxu0 %v2168
    %v2320 = vpop.f32.mrb[0].mxu0
    %v2321 = vadd.f32 0.0, %v2320
    %v2322 = vpop.f32.mrb[0].mxu0
    %v2323 = vadd.f32 0.0, %v2322
    %2324 = vmatprep.mubr.f32.mxu0 0.0
    %2325 = vmatmul.mubr.f32.gmra.mrb[0].mxu0 %v2171
    %v2326 = vpop.f32.mrb[0].mxu0
    %v2327 = vadd.f32 0.0, %v2326
    %v2328 = vpop.f32.mrb[0].mxu0
    %v2329 = vadd.f32 0.0, %v2328
    %2330 = vmatprep.mubr.f32.mxu0 0.0
    %2331 = vmatmul.mubr.f32.gmra.mrb[0].mxu0 %v2174
    %v2332 = vpop.f32.mrb[0].mxu0
    %v2333 = vadd.f32 0.0, %v2332
    %v2334 = vpop.f32.mrb[0].mxu0
    %v2335 = vadd.f32 0.0, %v2334
    %2336 = vdwg.mxu0
    %v2337 = vmax.f32 %v2243, %v2245
    %2338 = vmax.xlane.f32.xlu0 %v2337
    %v2339 = vpop.xlane.xlu0 %2338
    %v2340 = vmax.f32 %v2249, %v2251
    %2341 = vmax.xlane.f32.xlu0 %v2340
    %v2342 = vpop.xlane.xlu0 %2341
    %v2343 = vmax.f32 %v2255, %v2257
    %2344 = vmax.xlane.f32.xlu0 %v2343
    %v2345 = vpop.xlane.xlu0 %2344
    %v2346 = vmax.f32 %v2261, %v2263
    %2347 = vmax.xlane.f32.xlu0 %v2346
    %v2348 = vpop.xlane.xlu0 %2347
    %v2349 = vmax.f32 %v2267, %v2269
    %2350 = vmax.xlane.f32.xlu0 %v2349
    %v2351 = vpop.xlane.xlu0 %2350
    %v2352 = vmax.f32 %v2273, %v2275
    %2353 = vmax.xlane.f32.xlu0 %v2352
    %v2354 = vpop.xlane.xlu0 %2353
    %v2355 = vmax.f32 %v2279, %v2281
    %2356 = vmax.xlane.f32.xlu0 %v2355
    %v2357 = vpop.xlane.xlu0 %2356
    %v2358 = vmax.f32 %v2285, %v2287
    %2359 = vmax.xlane.f32.xlu0 %v2358
    %v2360 = vpop.xlane.xlu0 %2359
    %v2361 = vmax.f32 %v2291, %v2293
    %2362 = vmax.xlane.f32.xlu0 %v2361
    %v2363 = vpop.xlane.xlu0 %2362
    %v2364 = vmax.f32 %v2297, %v2299
    %2365 = vmax.xlane.f32.xlu0 %v2364
    %v2366 = vpop.xlane.xlu0 %2365
    %v2367 = vmax.f32 %v2303, %v2305
    %2368 = vmax.xlane.f32.xlu0 %v2367
    %v2369 = vpop.xlane.xlu0 %2368
    %v2370 = vmax.f32 %v2309, %v2311
    %2371 = vmax.xlane.f32.xlu0 %v2370
    %v2372 = vpop.xlane.xlu0 %2371
    %v2373 = vmax.f32 %v2315, %v2317
    %2374 = vmax.xlane.f32.xlu0 %v2373
    %v2375 = vpop.xlane.xlu0 %2374
    %v2376 = vmax.f32 %v2321, %v2323
    %2377 = vmax.xlane.f32.xlu0 %v2376
    %v2378 = vpop.xlane.xlu0 %2377
    %v2379 = vmax.f32 %v2327, %v2329
    %2380 = vmax.xlane.f32.xlu0 %v2379
    %v2381 = vpop.xlane.xlu0 %2380
    %v2382 = vmax.f32 %v2333, %v2335
    %2383 = vmax.xlane.f32.xlu0 %v2382
    %v2384 = vpop.xlane.xlu0 %2383
    %v2385 = vsub.f32 %v2243, %v2339
    %v2386 = vsub.f32 %v2245, %v2339
    %v2387 = vsub.f32 %v2249, %v2342
    %v2388 = vsub.f32 %v2251, %v2342
    %v2389 = vsub.f32 %v2255, %v2345
    %v2390 = vsub.f32 %v2257, %v2345
    %v2391 = vsub.f32 %v2261, %v2348
    %v2392 = vsub.f32 %v2263, %v2348
    %v2393 = vsub.f32 %v2267, %v2351
    %v2394 = vsub.f32 %v2269, %v2351
    %v2395 = vsub.f32 %v2273, %v2354
    %v2396 = vsub.f32 %v2275, %v2354
    %v2397 = vsub.f32 %v2279, %v2357
    %v2398 = vsub.f32 %v2281, %v2357
    %v2399 = vsub.f32 %v2285, %v2360
    %v2400 = vsub.f32 %v2287, %v2360
    %v2401 = vsub.f32 %v2291, %v2363
    %v2402 = vsub.f32 %v2293, %v2363
    %v2403 = vsub.f32 %v2297, %v2366
    %v2404 = vsub.f32 %v2299, %v2366
    %v2405 = vsub.f32 %v2303, %v2369
    %v2406 = vsub.f32 %v2305, %v2369
    %v2407 = vsub.f32 %v2309, %v2372
    %v2408 = vsub.f32 %v2311, %v2372
    %v2409 = vsub.f32 %v2315, %v2375
    %v2410 = vsub.f32 %v2317, %v2375
    %v2411 = vsub.f32 %v2321, %v2378
    %v2412 = vsub.f32 %v2323, %v2378
    %v2413 = vsub.f32 %v2327, %v2381
    %v2414 = vsub.f32 %v2329, %v2381
    %v2415 = vsub.f32 %v2333, %v2384
    %v2416 = vsub.f32 %v2335, %v2384
    %v2417 = vmul.f32 %v2385, 1.442695
    %v2418 = vpow.pop %v2417
    %v2419 = vmul.f32 %v2386, 1.442695
    %v2420 = vpow.pop %v2419
    %v2421 = vmul.f32 %v2387, 1.442695
    %v2422 = vpow.pop %v2421
    %v2423 = vmul.f32 %v2388, 1.442695
    %v2424 = vpow.pop %v2423
    %v2425 = vmul.f32 %v2389, 1.442695
    %v2426 = vpow.pop %v2425
    %v2427 = vmul.f32 %v2390, 1.442695
    %v2428 = vpow.pop %v2427
    %v2429 = vmul.f32 %v2391, 1.442695
    %v2430 = vpow.pop %v2429
    %v2431 = vmul.f32 %v2392, 1.442695
    %v2432 = vpow.pop %v2431
    %v2433 = vmul.f32 %v2393, 1.442695
    %v2434 = vpow.pop %v2433
    %v2435 = vmul.f32 %v2394, 1.442695
    %v2436 = vpow.pop %v2435
    %v2437 = vmul.f32 %v2395, 1.442695
    %v2438 = vpow.pop %v2437
    %v2439 = vmul.f32 %v2396, 1.442695
    %v2440 = vpow.pop %v2439
    %v2441 = vmul.f32 %v2397, 1.442695
    %v2442 = vpow.pop %v2441
    %v2443 = vmul.f32 %v2398, 1.442695
    %v2444 = vpow.pop %v2443
    %v2445 = vmul.f32 %v2399, 1.442695
    %v2446 = vpow.pop %v2445
    %v2447 = vmul.f32 %v2400, 1.442695
    %v2448 = vpow.pop %v2447
    %v2449 = vmul.f32 %v2401, 1.442695
    %v2450 = vpow.pop %v2449
    %v2451 = vmul.f32 %v2402, 1.442695
    %v2452 = vpow.pop %v2451
    %v2453 = vmul.f32 %v2403, 1.442695
    %v2454 = vpow.pop %v2453
    %v2455 = vmul.f32 %v2404, 1.442695
    %v2456 = vpow.pop %v2455
    %v2457 = vmul.f32 %v2405, 1.442695
    %v2458 = vpow.pop %v2457
    %v2459 = vmul.f32 %v2406, 1.442695
    %v2460 = vpow.pop %v2459
    %v2461 = vmul.f32 %v2407, 1.442695
    %v2462 = vpow.pop %v2461
    %v2463 = vmul.f32 %v2408, 1.442695
    %v2464 = vpow.pop %v2463
    %v2465 = vmul.f32 %v2409, 1.442695
    %v2466 = vpow.pop %v2465
    %v2467 = vmul.f32 %v2410, 1.442695
    %v2468 = vpow.pop %v2467
    %v2469 = vmul.f32 %v2411, 1.442695
    %v2470 = vpow.pop %v2469
    %v2471 = vmul.f32 %v2412, 1.442695
    %v2472 = vpow.pop %v2471
    %v2473 = vmul.f32 %v2413, 1.442695
    %v2474 = vpow.pop %v2473
    %v2475 = vmul.f32 %v2414, 1.442695
    %v2476 = vpow.pop %v2475
    %v2477 = vmul.f32 %v2415, 1.442695
    %v2478 = vpow.pop %v2477
    %v2479 = vmul.f32 %v2416, 1.442695
    %v2480 = vpow.pop %v2479
    %2481 = vmatprep.subr.mxu0 %v2420
    %2482 = vmatpush1.xpose.msra.mxu0 %v2418
    %2483 = vmatprep.subr.mxu0 %v2424
    %2484 = vmatpush1.xpose.msra.mxu0 %v2422
    %2485 = vmatprep.subr.mxu0 %v2428
    %2486 = vmatpush1.xpose.msra.mxu0 %v2426
    %2487 = vmatprep.subr.mxu0 %v2432
    %2488 = vmatpush1.xpose.msra.mxu0 %v2430
    %2489 = vmatprep.subr.mxu0 %v2436
    %2490 = vmatpush1.xpose.msra.mxu0 %v2434
    %2491 = vmatprep.subr.mxu0 %v2440
    %2492 = vmatpush1.xpose.msra.mxu0 %v2438
    %2493 = vmatprep.subr.mxu0 %v2444
    %2494 = vmatpush1.xpose.msra.mxu0 %v2442
    %2495 = vmatprep.subr.mxu0 %v2448
    %2496 = vmatpush1.xpose.msra.mxu0 %v2446
    %2497 = vmatprep.subr.mxu0 %v2452
    %2498 = vmatpush1.xpose.msra.mxu0 %v2450
    %2499 = vmatprep.subr.mxu0 %v2456
    %2500 = vmatpush1.xpose.msra.mxu0 %v2454
    %2501 = vmatprep.subr.mxu0 %v2460
    %2502 = vmatpush1.xpose.msra.mxu0 %v2458
    %2503 = vmatprep.subr.mxu0 %v2464
    %2504 = vmatpush1.xpose.msra.mxu0 %v2462
    %2505 = vmatprep.subr.mxu0 %v2468
    %2506 = vmatpush1.xpose.msra.mxu0 %v2466
    %2507 = vmatprep.subr.mxu0 %v2472
    %2508 = vmatpush1.xpose.msra.mxu0 %v2470
    %2509 = vmatprep.subr.mxu0 %v2476
    %2510 = vmatpush1.xpose.msra.mxu0 %v2474
    %2511 = vmatprep.subr.mxu0 %v2480
    %2512 = vmatpush1.xpose.msra.mxu0 %v2478
    %2513 = vmatprep.subr.mxu0 0.0
    %2514 = vmatpush1.xpose.msra.mxu0 0.0
    %2515 = vmatprep.subr.mxu0 0.0
    %2516 = vmatpush1.xpose.msra.mxu0 0.0
    %2517 = vmatprep.subr.mxu0 0.0
    %2518 = vmatpush1.xpose.msra.mxu0 0.0
    %2519 = vmatprep.subr.mxu0 0.0
    %2520 = vmatpush1.xpose.msra.mxu0 0.0
    %2521 = vmatprep.subr.mxu0 0.0
    %2522 = vmatpush1.xpose.msra.mxu0 0.0
    %2523 = vmatprep.subr.mxu0 0.0
    %2524 = vmatpush1.xpose.msra.mxu0 0.0
    %2525 = vmatprep.subr.mxu0 0.0
    %2526 = vmatpush1.xpose.msra.mxu0 0.0
    %2527 = vmatprep.subr.mxu0 0.0
    %2528 = vmatpush1.xpose.msra.mxu0 0.0
    %2529 = vmatprep.subr.mxu0 0.0
    %2530 = vmatpush1.xpose.msra.mxu0 0.0
    %2531 = vmatprep.subr.mxu0 0.0
    %2532 = vmatpush1.xpose.msra.mxu0 0.0
    %2533 = vmatprep.subr.mxu0 0.0
    %2534 = vmatpush1.xpose.msra.mxu0 0.0
    %2535 = vmatprep.subr.mxu0 0.0
    %2536 = vmatpush1.xpose.msra.mxu0 0.0
    %2537 = vmatprep.subr.mxu0 0.0
    %2538 = vmatpush1.xpose.msra.mxu0 0.0
    %2539 = vmatprep.subr.mxu0 0.0
    %2540 = vmatpush1.xpose.msra.mxu0 0.0
    %2541 = vmatprep.subr.mxu0 0.0
    %2542 = vmatpush1.xpose.msra.mxu0 0.0
    %2543 = vmatprep.subr.mxu0 0.0
    %2544 = vmatpush1.xpose.msra.mxu0 0.0
    %2545 = vmatprep.mubr.f32.mxu0 %v1479
    %2546 = vmatmul.mubr.f32.gmra.mrb[0].mxu0 %v1477
    %v2547 = vpop.f32.mrb[0].mxu0
    %v2548 = vadd.f32 0.0, %v2547
    %v2549 = vpop.f32.mrb[0].mxu0
    %2550 = vdwg.mxu0
    %2551 = vmatprep.subr.mxu0 %v2420
    %2552 = vmatpush1.xpose.msra.mxu0 %v2418
    %2553 = vmatprep.subr.mxu0 %v2424
    %2554 = vmatpush1.xpose.msra.mxu0 %v2422
    %2555 = vmatprep.subr.mxu0 %v2428
    %2556 = vmatpush1.xpose.msra.mxu0 %v2426
    %2557 = vmatprep.subr.mxu0 %v2432
    %2558 = vmatpush1.xpose.msra.mxu0 %v2430
    %2559 = vmatprep.subr.mxu0 %v2436
    %2560 = vmatpush1.xpose.msra.mxu0 %v2434
    %2561 = vmatprep.subr.mxu0 %v2440
    %2562 = vmatpush1.xpose.msra.mxu0 %v2438
    %2563 = vmatprep.subr.mxu0 %v2444
    %2564 = vmatpush1.xpose.msra.mxu0 %v2442
    %2565 = vmatprep.subr.mxu0 %v2448
    %2566 = vmatpush1.xpose.msra.mxu0 %v2446
    %2567 = vmatprep.subr.mxu0 %v2452
    %2568 = vmatpush1.xpose.msra.mxu0 %v2450
    %2569 = vmatprep.subr.mxu0 %v2456
    %2570 = vmatpush1.xpose.msra.mxu0 %v2454
    %2571 = vmatprep.subr.mxu0 %v2460
    %2572 = vmatpush1.xpose.msra.mxu0 %v2458
    %2573 = vmatprep.subr.mxu0 %v2464
    %2574 = vmatpush1.xpose.msra.mxu0 %v2462
    %2575 = vmatprep.subr.mxu0 %v2468
    %2576 = vmatpush1.xpose.msra.mxu0 %v2466
    %2577 = vmatprep.subr.mxu0 %v2472
    %2578 = vmatpush1.xpose.msra.mxu0 %v2470
    %2579 = vmatprep.subr.mxu0 %v2476
    %2580 = vmatpush1.xpose.msra.mxu0 %v2474
    %2581 = vmatprep.subr.mxu0 %v2480
    %2582 = vmatpush1.xpose.msra.mxu0 %v2478
    %2583 = vmatprep.subr.mxu0 0.0
    %2584 = vmatpush1.xpose.msra.mxu0 0.0
    %2585 = vmatprep.subr.mxu0 0.0
    %2586 = vmatpush1.xpose.msra.mxu0 0.0
    %2587 = vmatprep.subr.mxu0 0.0
    %2588 = vmatpush1.xpose.msra.mxu0 0.0
    %2589 = vmatprep.subr.mxu0 0.0
    %2590 = vmatpush1.xpose.msra.mxu0 0.0
    %2591 = vmatprep.subr.mxu0 0.0
    %2592 = vmatpush1.xpose.msra.mxu0 0.0
    %2593 = vmatprep.subr.mxu0 0.0
    %2594 = vmatpush1.xpose.msra.mxu0 0.0
    %2595 = vmatprep.subr.mxu0 0.0
    %2596 = vmatpush1.xpose.msra.mxu0 0.0
    %2597 = vmatprep.subr.mxu0 0.0
    %2598 = vmatpush1.xpose.msra.mxu0 0.0
    %2599 = vmatprep.subr.mxu0 0.0
    %2600 = vmatpush1.xpose.msra.mxu0 0.0
    %2601 = vmatprep.subr.mxu0 0.0
    %2602 = vmatpush1.xpose.msra.mxu0 0.0
    %2603 = vmatprep.subr.mxu0 0.0
    %2604 = vmatpush1.xpose.msra.mxu0 0.0
    %2605 = vmatprep.subr.mxu0 0.0
    %2606 = vmatpush1.xpose.msra.mxu0 0.0
    %2607 = vmatprep.subr.mxu0 0.0
    %2608 = vmatpush1.xpose.msra.mxu0 0.0
    %2609 = vmatprep.subr.mxu0 0.0
    %2610 = vmatpush1.xpose.msra.mxu0 0.0
    %2611 = vmatprep.subr.mxu0 0.0
    %2612 = vmatpush1.xpose.msra.mxu0 0.0
    %2613 = vmatprep.subr.mxu0 0.0
    %2614 = vmatpush1.xpose.msra.mxu0 0.0
    %2615 = vmatprep.mubr.f32.mxu0 1.0
    %2616 = vmatmul.mubr.f32.gmra.mrb[0].mxu0 1.0
    %v2617 = vpop.f32.mrb[0].mxu0
    %v2618 = vadd.f32 0.0, %v2617
    %v2619 = vpop.f32.mrb[0].mxu0
    %2620 = vdwg.mxu0
    %v2621 = vrcp.pop %v2618
    %v2622 = vlaneseq
    %v2623 = vshrl.u32 %v2622, 7
    %v2624 = vsub.s32 0, %v2623
    %v2625 = vrot.slane %v2621, %v2624
    %v2626 = vmul.f32 %v2548, %v2625
    %v2627 = vld [vmem:[%s3] sm:$0xff]
    %v2629 = vsel %vm44, %v2627, 0
    %2631 = vmatprep.subr.mxu0 0.0
    %2632 = vmatpush1.msra.mxu0 %v2626
    %2633 = vmatprep.subr.mxu0 0.0
    %2634 = vmatpush1.msra.mxu0 0.0
    %2635 = vmatprep.subr.mxu0 0.0
    %2636 = vmatpush1.msra.mxu0 0.0
    %2637 = vmatprep.subr.mxu0 0.0
    %2638 = vmatpush1.msra.mxu0 0.0
    %2639 = vmatprep.subr.mxu0 0.0
    %2640 = vmatpush1.msra.mxu0 0.0
    %2641 = vmatprep.subr.mxu0 0.0
    %2642 = vmatpush1.msra.mxu0 0.0
    %2643 = vmatprep.subr.mxu0 0.0
    %2644 = vmatpush1.msra.mxu0 0.0
    %2645 = vmatprep.subr.mxu0 0.0
    %2646 = vmatpush1.msra.mxu0 0.0
    %2647 = vmatprep.subr.mxu0 0.0
    %2648 = vmatpush1.msra.mxu0 0.0
    %2649 = vmatprep.subr.mxu0 0.0
    %2650 = vmatpush1.msra.mxu0 0.0
    %2651 = vmatprep.subr.mxu0 0.0
    %2652 = vmatpush1.msra.mxu0 0.0
    %2653 = vmatprep.subr.mxu0 0.0
    %2654 = vmatpush1.msra.mxu0 0.0
    %2655 = vmatprep.subr.mxu0 0.0
    %2656 = vmatpush1.msra.mxu0 0.0
    %2657 = vmatprep.subr.mxu0 0.0
    %2658 = vmatpush1.msra.mxu0 0.0
    %2659 = vmatprep.subr.mxu0 0.0
    %2660 = vmatpush1.msra.mxu0 0.0
    %2661 = vmatprep.subr.mxu0 0.0
    %2662 = vmatpush1.msra.mxu0 0.0
    %2663 = vmatprep.subr.mxu0 0.0
    %2664 = vmatpush1.msra.mxu0 0.0
    %2665 = vmatprep.subr.mxu0 0.0
    %2666 = vmatpush1.msra.mxu0 0.0
    %2667 = vmatprep.subr.mxu0 0.0
    %2668 = vmatpush1.msra.mxu0 0.0
    %2669 = vmatprep.subr.mxu0 0.0
    %2670 = vmatpush1.msra.mxu0 0.0
    %2671 = vmatprep.subr.mxu0 0.0
    %2672 = vmatpush1.msra.mxu0 0.0
    %2673 = vmatprep.subr.mxu0 0.0
    %2674 = vmatpush1.msra.mxu0 0.0
    %2675 = vmatprep.subr.mxu0 0.0
    %2676 = vmatpush1.msra.mxu0 0.0
    %2677 = vmatprep.subr.mxu0 0.0
    %2678 = vmatpush1.msra.mxu0 0.0
    %2679 = vmatprep.subr.mxu0 0.0
    %2680 = vmatpush1.msra.mxu0 0.0
    %2681 = vmatprep.subr.mxu0 0.0
    %2682 = vmatpush1.msra.mxu0 0.0
    %2683 = vmatprep.subr.mxu0 0.0
    %2684 = vmatpush1.msra.mxu0 0.0
    %2685 = vmatprep.subr.mxu0 0.0
    %2686 = vmatpush1.msra.mxu0 0.0
    %2687 = vmatprep.subr.mxu0 0.0
    %2688 = vmatpush1.msra.mxu0 0.0
    %2689 = vmatprep.subr.mxu0 0.0
    %2690 = vmatpush1.msra.mxu0 0.0
    %2691 = vmatprep.subr.mxu0 0.0
    %2692 = vmatpush1.msra.mxu0 0.0
    %2693 = vmatprep.subr.mxu0 0.0
    %2694 = vmatpush1.msra.mxu0 0.0
    %2695 = vmatprep.mubr.f32.mxu0 0.0
    %2696 = vmatmul.mubr.f32.gmra.mrb[0].mxu0 %v2629
    %v2697 = vpop.f32.mrb[0].mxu0
    %v2698 = vadd.f32 0.0, %v2697
    %v2699 = vpop.f32.mrb[0].mxu0
    %2700 = vdwg.mxu0
    %v2701 = vld [vmem:[%s4] sm:$0xff]
    %2703 = vset.pattern.permute.xlu0 0
    %2704 = vperm.xlu0 %2703, %v2701
    %v2705 = vpop.permute.xlu0 %2704
    %v2707 = vadd.f32 %v1367, %v2705
    %v2708 = vadd.f32 %v2707, %v2698
    %2709 = vst [vmem:[%s2094 + $0x8] sm:$0xff] %v2708
    // Predicated region
    $region22: #{tpu_custom_call.1} parent=1 // pred_check
      _
    $region23: #{tpu_custom_call.1} parent=1 // pred_check_branch
      %2711 = sbr.rel (0) target = $region25
    $region24: #{tpu_custom_call.1} parent=1 // pred_region
      %s2713 = ssub.s32 512, 512
      %2714 = vsyncadd [#allocation3], %s2713
      %s2715 = sshll.u32 [#allocation2], 4
      %s2716 = int_to_ptr.vmem [resolvable:$true] %s2715
      %2721 = dma.vmem_to_hbm [thread:$0]  %s2716, 512, %s5, [#allocation3], 256, 256, 16
    $region25: #{tpu_custom_call.1} parent=1 // pred_fallthru
      _
    // Predicated region
    $region26: #{tpu_custom_call.1} parent=1 // pred_check
      _
    $region27: #{tpu_custom_call.1} parent=1 // pred_check_branch
      %2723 = sbr.rel (0) target = $region29
    $region28: #{tpu_custom_call.1} parent=1 // pred_region
      %2724 = dma.done [#allocation3], 512
    $region29: #{tpu_custom_call.1} parent=1 // pred_fallthru
      _
    %2725 = vsyncpa [#allocation3], 1

</llo_original>
